<compile_context>
chip_gen: v7x
topology: tpu7x:2x2x1
jax: 0.10.0
libtpu: 0.0.40
codegen_flags: <defaults>
</compile_context>

<pallas_src>
import math
import functools

import jax
import jax.numpy as jnp
from jax.experimental import pallas as pl
from jax.experimental.pallas import tpu as pltpu

# ------------------------- model configuration (small) -------------------------
B, S, D = 2, 8, 32          # batch, seq, hidden
H, HD = 4, 8                # heads, head_dim (D = H * HD)


# ------------------------------ fused Pallas kernel ----------------------------

def _gpt_sparse_attn_kernel(x_ref, wqkv_ref, bqkv_ref, wo_ref, bo_ref,
                            mqk_ref, mv_ref, am_ref,
                            out_ref, aw_ref, *, num_heads, scale):
    b, s, d = x_ref.shape
    hd = d // num_heads

    # ---- fused qkv projection (+bias), lane-dense [B*S, 3D] ----
    x = x_ref[...].astype(jnp.float32).reshape(b * s, d)
    qkv = jnp.dot(x, wqkv_ref[...], preferred_element_type=jnp.float32) + bqkv_ref[...]

    # ---- training-time sparsity masks (mask[:D] on q & k, mask[D:] on v) ----
    # 1/sqrt(head_dim) is folded into the query mask multiply (scores are
    # bilinear in q, so this is exactly the reference scaling).
    mqk = mqk_ref[...]                       # (1, d)
    mv = mv_ref[...]                         # (1, d)
    q2d = qkv[:, :d] * (mqk * scale)
    k2d = qkv[:, d:2 * d] * mqk
    v2d = qkv[:, 2 * d:] * mv

    am = am_ref[...][:, 0].astype(jnp.float32)   # (b, s, s) additive attention mask

    # ---- per-head scaled-dot-product attention (static unroll over heads) ----
    ctx_heads = []
    weight_heads = []
    for h in range(num_heads):
        lo, hi = h * hd, (h + 1) * hd
        qh = q2d[:, lo:hi].reshape(b, s, hd)
        kh = k2d[:, lo:hi].reshape(b, s, hd)
        vh = v2d[:, lo:hi].reshape(b, s, hd)

        sc = jnp.einsum('bqd,bkd->bqk', qh, kh,
                        preferred_element_type=jnp.float32) + am
        m = jnp.max(sc, axis=-1, keepdims=True)
        e = jnp.exp(sc - m)                                       # EUP
        p = e * pl.reciprocal(jnp.sum(e, axis=-1, keepdims=True), approx=True)

        ctx = jnp.einsum('bqk,bkd->bqd', p, vh, preferred_element_type=jnp.float32)
        ctx_heads.append(ctx.reshape(b * s, hd))
        weight_heads.append(p.reshape(b, 1, s, s))

    # ---- merge heads (lane concat) + output projection (+bias) + store ----
    attn2d = jnp.concatenate(ctx_heads, axis=-1)                 # (b*s, d)
    y = jnp.dot(attn2d, wo_ref[...], preferred_element_type=jnp.float32) + bo_ref[...]
    out_ref[...] = y.reshape(b, s, d).astype(out_ref.dtype)
    aw_ref[...] = jnp.concatenate(weight_heads, axis=1).astype(aw_ref.dtype)


def gpt_sparse_attn_forward(params, hidden_states, attention_mask):
    b, s, d = hidden_states.shape
    h = H
    hd = d // h
    vmem = pl.BlockSpec(memory_space=pltpu.MemorySpace.VMEM)
    out, attn_weights = pl.pallas_call(
        functools.partial(_gpt_sparse_attn_kernel,
                          num_heads=h, scale=1.0 / math.sqrt(hd)),
        out_shape=(jax.ShapeDtypeStruct((b, s, d), hidden_states.dtype),
                   jax.ShapeDtypeStruct((b, h, s, s), jnp.float32)),
        in_specs=[vmem] * 8,
        out_specs=(vmem, vmem),
    )(hidden_states, params['wqkv_t'], params['bqkv'], params['wo_t'],
      params['bo2'], params['mask_qk'], params['mask_v'], attention_mask)
    # (attn_output, attn_weights, past_key_value) like the PyTorch module.
    return out, attn_weights, None


# ------------------------- pure-JAX reference (check) --------------------------

def reference_forward(params, x, attention_mask):
    hp = jax.lax.Precision.HIGHEST
    b, s, d = x.shape
    mask_qk = params['mask'][:d]
    mask_v = params['mask'][d:]

    q = jnp.einsum('bsd,nd->bsn', x, params['wq'], precision=hp) + params['bq']
    k = jnp.einsum('bsd,nd->bsn', x, params['wk'], precision=hp) + params['bk']
    v = jnp.einsum('bsd,nd->bsn', x, params['wv'], precision=hp) + params['bv']
    q = q * mask_qk
    k = k * mask_qk
    v = v * mask_v

    q = q.reshape(b, s, H, HD).transpose(0, 2, 1, 3)
    k = k.reshape(b, s, H, HD).transpose(0, 2, 1, 3)
    v = v.reshape(b, s, H, HD).transpose(0, 2, 1, 3)

    scores = jnp.einsum('bhqd,bhkd->bhqk', q, k, precision=hp) / math.sqrt(HD)
    scores = scores + attention_mask                      # [B,1,S,S] broadcasts over heads
    attn = jax.nn.softmax(scores.astype(jnp.float32), axis=-1)
    ctx = jnp.einsum('bhqk,bhkd->bhqd', attn, v, precision=hp)
    ctx = ctx.transpose(0, 2, 1, 3).reshape(b, s, d)
    out = jnp.einsum('bsd,nd->bsn', ctx, params['wo'], precision=hp) + params['bo']
    return out, attn


# ----------------------------------- setup --------------------------------------

def make_params(key):
    ks = jax.random.split(key, 8)
    scale = 0.05
    wq = scale * jax.random.normal(ks[0], (D, D), jnp.float32)   # PyTorch [out, in]
    wk = scale * jax.random.normal(ks[1], (D, D), jnp.float32)
    wv = scale * jax.random.normal(ks[2], (D, D), jnp.float32)
    wo = scale * jax.random.normal(ks[3], (D, D), jnp.float32)
    bq = 0.02 * jax.random.normal(ks[4], (D,), jnp.float32)
    bk = 0.02 * jax.random.normal(ks[5], (D,), jnp.float32)
    bv = 0.02 * jax.random.normal(ks[6], (D,), jnp.float32)
    bo = 0.02 * jax.random.normal(ks[7], (D,), jnp.float32)

    # sparsity mask parameter of size 2*D: first D gate query & key, last D gate value
    idx = jnp.arange(D)
    mask_qk = jnp.where(idx % 8 == 7, 0.0,
                        jnp.where(idx % 8 == 3, 0.9, 1.0)).astype(jnp.float32)
    mask_v = jnp.where(idx % 8 == 5, 0.0, 1.0).astype(jnp.float32)
    mask_full = jnp.concatenate([mask_qk, mask_v])

    return dict(
        # PyTorch-layout params (used by the pure-JAX reference)
        wq=wq, wk=wk, wv=wv, wo=wo, bq=bq, bk=bk, bv=bv, bo=bo, mask=mask_full,
        # kernel-ready params: pre-transposed / pre-concatenated ONCE here
        wqkv_t=jnp.concatenate([wq.T, wk.T, wv.T], axis=1),        # [D, 3D]
        bqkv=jnp.concatenate([bq, bk, bv]).reshape(1, 3 * D),
        wo_t=wo.T,
        bo2=bo.reshape(1, D),
        mask_qk=mask_qk.reshape(1, D),
        mask_v=mask_v.reshape(1, D),
    )


if __name__ == "__main__":
    key = jax.random.PRNGKey(0)
    pkey, xkey = jax.random.split(key)
    params = make_params(pkey)
    hidden_states = jax.random.normal(xkey, (B, S, D), jnp.float32)

    # HF-style additive causal attention mask [B, 1, S, S]
    qi = jax.lax.broadcasted_iota(jnp.int32, (S, S), 0)
    ki = jax.lax.broadcasted_iota(jnp.int32, (S, S), 1)
    causal = jnp.where(qi >= ki, 0.0, -1e9).astype(jnp.float32)
    attention_mask = jnp.broadcast_to(causal[None, None], (B, 1, S, S))

    out, attn_w, past_kv = gpt_sparse_attn_forward(params, hidden_states, attention_mask)
    out = jax.block_until_ready(out)
    attn_w = jax.block_until_ready(attn_w)

    ref_out, ref_w = reference_forward(params, hidden_states, attention_mask)
    ref_out = jax.block_until_ready(ref_out)

    assert out.shape == (B, S, D)
    assert attn_w.shape == (B, H, S, S)
    assert past_kv is None
    err_o = float(jnp.max(jnp.abs(out - ref_out)))
    err_w = float(jnp.max(jnp.abs(attn_w - ref_w)))
    assert err_o < 2e-3, f"attn_output mismatch: max abs err {err_o}"
    assert err_w < 2e-3, f"attn_weights mismatch: max abs err {err_w}"

    print("KERNEL_OK")
</pallas_src>

<mosaic_0001>
module attributes {stable_mosaic.version = 11 : i64} {
  func.func @_gpt_sparse_attn_kernel(%arg0: memref<2x8x32xf32, #tpu.memory_space<vmem>>, %arg1: memref<32x96xf32, #tpu.memory_space<vmem>>, %arg2: memref<1x96xf32, #tpu.memory_space<vmem>>, %arg3: memref<32x32xf32, #tpu.memory_space<vmem>>, %arg4: memref<1x32xf32, #tpu.memory_space<vmem>>, %arg5: memref<1x32xf32, #tpu.memory_space<vmem>>, %arg6: memref<1x32xf32, #tpu.memory_space<vmem>>, %arg7: memref<2x1x8x8xf32, #tpu.memory_space<vmem>>, %arg8: memref<2x8x32xf32, #tpu.memory_space<vmem>>, %arg9: memref<2x4x8x8xf32, #tpu.memory_space<vmem>>) attributes {dimension_semantics = [], scalar_prefetch = 0 : i64, scratch_operands = 0 : i64, tpu.core_type = #tpu.core_type<tc>} {
    %c0 = arith.constant 0 : index
    %c0_0 = arith.constant 0 : index
    %c0_1 = arith.constant 0 : index
    %0 = vector.load %arg0[%c0, %c0_0, %c0_1] : memref<2x8x32xf32, #tpu.memory_space<vmem>>, vector<2x8x32xf32>
    %1 = vector.shape_cast %0 : vector<2x8x32xf32> to vector<16x32xf32>
    %c0_2 = arith.constant 0 : index
    %c0_3 = arith.constant 0 : index
    %2 = vector.load %arg1[%c0_2, %c0_3] : memref<32x96xf32, #tpu.memory_space<vmem>>, vector<32x96xf32>
    %cst = arith.constant dense<0.000000e+00> : vector<16x96xf32>
    %3 = tpu.matmul %1, %2, %cst {dimension_numbers = #tpu.dot_dimension_numbers<[1], [0], [0], [1], [0, 0, 1, 1], [], []>} : vector<16x32xf32>, vector<32x96xf32>, vector<16x96xf32> -> vector<16x96xf32>
    %c0_4 = arith.constant 0 : index
    %c0_5 = arith.constant 0 : index
    %4 = vector.load %arg2[%c0_4, %c0_5] : memref<1x96xf32, #tpu.memory_space<vmem>>, vector<1x96xf32>
    %5 = vector.broadcast %4 : vector<1x96xf32> to vector<16x96xf32>
    %6 = arith.addf %3, %5 : vector<16x96xf32>
    %c0_6 = arith.constant 0 : index
    %c0_7 = arith.constant 0 : index
    %7 = vector.load %arg5[%c0_6, %c0_7] : memref<1x32xf32, #tpu.memory_space<vmem>>, vector<1x32xf32>
    %c0_8 = arith.constant 0 : index
    %c0_9 = arith.constant 0 : index
    %8 = vector.load %arg6[%c0_8, %c0_9] : memref<1x32xf32, #tpu.memory_space<vmem>>, vector<1x32xf32>
    %9 = vector.extract_strided_slice %6 {offsets = [0, 0], sizes = [16, 32], strides = [1, 1]} : vector<16x96xf32> to vector<16x32xf32>
    %cst_10 = arith.constant 0.353553385 : f32
    %10 = vector.broadcast %cst_10 : f32 to vector<1x32xf32>
    %11 = arith.mulf %7, %10 : vector<1x32xf32>
    %12 = vector.broadcast %11 : vector<1x32xf32> to vector<16x32xf32>
    %13 = arith.mulf %9, %12 : vector<16x32xf32>
    %14 = vector.extract_strided_slice %6 {offsets = [0, 32], sizes = [16, 32], strides = [1, 1]} : vector<16x96xf32> to vector<16x32xf32>
    %15 = vector.broadcast %7 : vector<1x32xf32> to vector<16x32xf32>
    %16 = arith.mulf %14, %15 : vector<16x32xf32>
    %17 = vector.extract_strided_slice %6 {offsets = [0, 64], sizes = [16, 32], strides = [1, 1]} : vector<16x96xf32> to vector<16x32xf32>
    %18 = vector.broadcast %8 : vector<1x32xf32> to vector<16x32xf32>
    %19 = arith.mulf %17, %18 : vector<16x32xf32>
    %c0_11 = arith.constant 0 : index
    %c0_12 = arith.constant 0 : index
    %c0_13 = arith.constant 0 : index
    %c0_14 = arith.constant 0 : index
    %20 = vector.load %arg7[%c0_11, %c0_12, %c0_13, %c0_14] : memref<2x1x8x8xf32, #tpu.memory_space<vmem>>, vector<2x1x8x8xf32>
    %21 = vector.shape_cast %20 : vector<2x1x8x8xf32> to vector<2x8x8xf32>
    %22 = vector.extract_strided_slice %13 {offsets = [0, 0], sizes = [16, 8], strides = [1, 1]} : vector<16x32xf32> to vector<16x8xf32>
    %23 = vector.shape_cast %22 : vector<16x8xf32> to vector<2x8x8xf32>
    %24 = vector.extract_strided_slice %16 {offsets = [0, 0], sizes = [16, 8], strides = [1, 1]} : vector<16x32xf32> to vector<16x8xf32>
    %25 = vector.shape_cast %24 : vector<16x8xf32> to vector<2x8x8xf32>
    %26 = vector.extract_strided_slice %19 {offsets = [0, 0], sizes = [16, 8], strides = [1, 1]} : vector<16x32xf32> to vector<16x8xf32>
    %27 = vector.shape_cast %26 : vector<16x8xf32> to vector<2x8x8xf32>
    "tpu.trace_start"() <{level = 10 : i32, message = "bqd,bkd->bqk"}> : () -> ()
    %cst_15 = arith.constant dense<0.000000e+00> : vector<2x8x8xf32>
    %28 = tpu.matmul %23, %25, %cst_15 {dimension_numbers = #tpu.dot_dimension_numbers<[2], [2], [1], [1], [0, 0, 0, 1, 1, 1], [0], [0]>} : vector<2x8x8xf32>, vector<2x8x8xf32>, vector<2x8x8xf32> -> vector<2x8x8xf32>
    "tpu.trace_stop"() : () -> ()
    %29 = arith.addf %28, %21 : vector<2x8x8xf32>
    %cst_16 = arith.constant dense<0xFF800000> : vector<2x8xf32>
    %30 = vector.multi_reduction <maximumf>, %29, %cst_16 [2] : vector<2x8x8xf32> to vector<2x8xf32>
    %31 = vector.shape_cast %30 : vector<2x8xf32> to vector<2x8x1xf32>
    %32 = vector.broadcast %31 : vector<2x8x1xf32> to vector<2x8x8xf32>
    %33 = arith.subf %29, %32 : vector<2x8x8xf32>
    %34 = math.exp %33 : vector<2x8x8xf32>
    %cst_17 = arith.constant dense<0.000000e+00> : vector<2x8xf32>
    %35 = vector.multi_reduction <add>, %34, %cst_17 [2] : vector<2x8x8xf32> to vector<2x8xf32>
    %36 = vector.shape_cast %35 : vector<2x8xf32> to vector<2x8x1xf32>
    %37 = tpu.reciprocal %36 {approx = true} : vector<2x8x1xf32> -> vector<2x8x1xf32>
    %38 = vector.broadcast %37 : vector<2x8x1xf32> to vector<2x8x8xf32>
    %39 = arith.mulf %34, %38 : vector<2x8x8xf32>
    "tpu.trace_start"() <{level = 10 : i32, message = "bqk,bkd->bqd"}> : () -> ()
    %cst_18 = arith.constant dense<0.000000e+00> : vector<2x8x8xf32>
    %40 = tpu.matmul %39, %27, %cst_18 {dimension_numbers = #tpu.dot_dimension_numbers<[2], [1], [1], [2], [0, 0, 0, 1, 1, 2], [0], [0]>} : vector<2x8x8xf32>, vector<2x8x8xf32>, vector<2x8x8xf32> -> vector<2x8x8xf32>
    "tpu.trace_stop"() : () -> ()
    %41 = vector.shape_cast %40 : vector<2x8x8xf32> to vector<16x8xf32>
    %42 = vector.shape_cast %39 : vector<2x8x8xf32> to vector<2x1x8x8xf32>
    %43 = vector.extract_strided_slice %13 {offsets = [0, 8], sizes = [16, 8], strides = [1, 1]} : vector<16x32xf32> to vector<16x8xf32>
    %44 = vector.shape_cast %43 : vector<16x8xf32> to vector<2x8x8xf32>
    %45 = vector.extract_strided_slice %16 {offsets = [0, 8], sizes = [16, 8], strides = [1, 1]} : vector<16x32xf32> to vector<16x8xf32>
    %46 = vector.shape_cast %45 : vector<16x8xf32> to vector<2x8x8xf32>
    %47 = vector.extract_strided_slice %19 {offsets = [0, 8], sizes = [16, 8], strides = [1, 1]} : vector<16x32xf32> to vector<16x8xf32>
    %48 = vector.shape_cast %47 : vector<16x8xf32> to vector<2x8x8xf32>
    "tpu.trace_start"() <{level = 10 : i32, message = "bqd,bkd->bqk"}> : () -> ()
    %cst_19 = arith.constant dense<0.000000e+00> : vector<2x8x8xf32>
    %49 = tpu.matmul %44, %46, %cst_19 {dimension_numbers = #tpu.dot_dimension_numbers<[2], [2], [1], [1], [0, 0, 0, 1, 1, 1], [0], [0]>} : vector<2x8x8xf32>, vector<2x8x8xf32>, vector<2x8x8xf32> -> vector<2x8x8xf32>
    "tpu.trace_stop"() : () -> ()
    %50 = arith.addf %49, %21 : vector<2x8x8xf32>
    %cst_20 = arith.constant dense<0xFF800000> : vector<2x8xf32>
    %51 = vector.multi_reduction <maximumf>, %50, %cst_20 [2] : vector<2x8x8xf32> to vector<2x8xf32>
    %52 = vector.shape_cast %51 : vector<2x8xf32> to vector<2x8x1xf32>
    %53 = vector.broadcast %52 : vector<2x8x1xf32> to vector<2x8x8xf32>
    %54 = arith.subf %50, %53 : vector<2x8x8xf32>
    %55 = math.exp %54 : vector<2x8x8xf32>
    %cst_21 = arith.constant dense<0.000000e+00> : vector<2x8xf32>
    %56 = vector.multi_reduction <add>, %55, %cst_21 [2] : vector<2x8x8xf32> to vector<2x8xf32>
    %57 = vector.shape_cast %56 : vector<2x8xf32> to vector<2x8x1xf32>
    %58 = tpu.reciprocal %57 {approx = true} : vector<2x8x1xf32> -> vector<2x8x1xf32>
    %59 = vector.broadcast %58 : vector<2x8x1xf32> to vector<2x8x8xf32>
    %60 = arith.mulf %55, %59 : vector<2x8x8xf32>
    "tpu.trace_start"() <{level = 10 : i32, message = "bqk,bkd->bqd"}> : () -> ()
    %cst_22 = arith.constant dense<0.000000e+00> : vector<2x8x8xf32>
    %61 = tpu.matmul %60, %48, %cst_22 {dimension_numbers = #tpu.dot_dimension_numbers<[2], [1], [1], [2], [0, 0, 0, 1, 1, 2], [0], [0]>} : vector<2x8x8xf32>, vector<2x8x8xf32>, vector<2x8x8xf32> -> vector<2x8x8xf32>
    "tpu.trace_stop"() : () -> ()
    %62 = vector.shape_cast %61 : vector<2x8x8xf32> to vector<16x8xf32>
    %63 = vector.shape_cast %60 : vector<2x8x8xf32> to vector<2x1x8x8xf32>
    %64 = vector.extract_strided_slice %13 {offsets = [0, 16], sizes = [16, 8], strides = [1, 1]} : vector<16x32xf32> to vector<16x8xf32>
    %65 = vector.shape_cast %64 : vector<16x8xf32> to vector<2x8x8xf32>
    %66 = vector.extract_strided_slice %16 {offsets = [0, 16], sizes = [16, 8], strides = [1, 1]} : vector<16x32xf32> to vector<16x8xf32>
    %67 = vector.shape_cast %66 : vector<16x8xf32> to vector<2x8x8xf32>
    %68 = vector.extract_strided_slice %19 {offsets = [0, 16], sizes = [16, 8], strides = [1, 1]} : vector<16x32xf32> to vector<16x8xf32>
    %69 = vector.shape_cast %68 : vector<16x8xf32> to vector<2x8x8xf32>
    "tpu.trace_start"() <{level = 10 : i32, message = "bqd,bkd->bqk"}> : () -> ()
    %cst_23 = arith.constant dense<0.000000e+00> : vector<2x8x8xf32>
    %70 = tpu.matmul %65, %67, %cst_23 {dimension_numbers = #tpu.dot_dimension_numbers<[2], [2], [1], [1], [0, 0, 0, 1, 1, 1], [0], [0]>} : vector<2x8x8xf32>, vector<2x8x8xf32>, vector<2x8x8xf32> -> vector<2x8x8xf32>
    "tpu.trace_stop"() : () -> ()
    %71 = arith.addf %70, %21 : vector<2x8x8xf32>
    %cst_24 = arith.constant dense<0xFF800000> : vector<2x8xf32>
    %72 = vector.multi_reduction <maximumf>, %71, %cst_24 [2] : vector<2x8x8xf32> to vector<2x8xf32>
    %73 = vector.shape_cast %72 : vector<2x8xf32> to vector<2x8x1xf32>
    %74 = vector.broadcast %73 : vector<2x8x1xf32> to vector<2x8x8xf32>
    %75 = arith.subf %71, %74 : vector<2x8x8xf32>
    %76 = math.exp %75 : vector<2x8x8xf32>
    %cst_25 = arith.constant dense<0.000000e+00> : vector<2x8xf32>
    %77 = vector.multi_reduction <add>, %76, %cst_25 [2] : vector<2x8x8xf32> to vector<2x8xf32>
    %78 = vector.shape_cast %77 : vector<2x8xf32> to vector<2x8x1xf32>
    %79 = tpu.reciprocal %78 {approx = true} : vector<2x8x1xf32> -> vector<2x8x1xf32>
    %80 = vector.broadcast %79 : vector<2x8x1xf32> to vector<2x8x8xf32>
    %81 = arith.mulf %76, %80 : vector<2x8x8xf32>
    "tpu.trace_start"() <{level = 10 : i32, message = "bqk,bkd->bqd"}> : () -> ()
    %cst_26 = arith.constant dense<0.000000e+00> : vector<2x8x8xf32>
    %82 = tpu.matmul %81, %69, %cst_26 {dimension_numbers = #tpu.dot_dimension_numbers<[2], [1], [1], [2], [0, 0, 0, 1, 1, 2], [0], [0]>} : vector<2x8x8xf32>, vector<2x8x8xf32>, vector<2x8x8xf32> -> vector<2x8x8xf32>
    "tpu.trace_stop"() : () -> ()
    %83 = vector.shape_cast %82 : vector<2x8x8xf32> to vector<16x8xf32>
    %84 = vector.shape_cast %81 : vector<2x8x8xf32> to vector<2x1x8x8xf32>
    %85 = vector.extract_strided_slice %13 {offsets = [0, 24], sizes = [16, 8], strides = [1, 1]} : vector<16x32xf32> to vector<16x8xf32>
    %86 = vector.shape_cast %85 : vector<16x8xf32> to vector<2x8x8xf32>
    %87 = vector.extract_strided_slice %16 {offsets = [0, 24], sizes = [16, 8], strides = [1, 1]} : vector<16x32xf32> to vector<16x8xf32>
    %88 = vector.shape_cast %87 : vector<16x8xf32> to vector<2x8x8xf32>
    %89 = vector.extract_strided_slice %19 {offsets = [0, 24], sizes = [16, 8], strides = [1, 1]} : vector<16x32xf32> to vector<16x8xf32>
    %90 = vector.shape_cast %89 : vector<16x8xf32> to vector<2x8x8xf32>
    "tpu.trace_start"() <{level = 10 : i32, message = "bqd,bkd->bqk"}> : () -> ()
    %cst_27 = arith.constant dense<0.000000e+00> : vector<2x8x8xf32>
    %91 = tpu.matmul %86, %88, %cst_27 {dimension_numbers = #tpu.dot_dimension_numbers<[2], [2], [1], [1], [0, 0, 0, 1, 1, 1], [0], [0]>} : vector<2x8x8xf32>, vector<2x8x8xf32>, vector<2x8x8xf32> -> vector<2x8x8xf32>
    "tpu.trace_stop"() : () -> ()
    %92 = arith.addf %91, %21 : vector<2x8x8xf32>
    %cst_28 = arith.constant dense<0xFF800000> : vector<2x8xf32>
    %93 = vector.multi_reduction <maximumf>, %92, %cst_28 [2] : vector<2x8x8xf32> to vector<2x8xf32>
    %94 = vector.shape_cast %93 : vector<2x8xf32> to vector<2x8x1xf32>
    %95 = vector.broadcast %94 : vector<2x8x1xf32> to vector<2x8x8xf32>
    %96 = arith.subf %92, %95 : vector<2x8x8xf32>
    %97 = math.exp %96 : vector<2x8x8xf32>
    %cst_29 = arith.constant dense<0.000000e+00> : vector<2x8xf32>
    %98 = vector.multi_reduction <add>, %97, %cst_29 [2] : vector<2x8x8xf32> to vector<2x8xf32>
    %99 = vector.shape_cast %98 : vector<2x8xf32> to vector<2x8x1xf32>
    %100 = tpu.reciprocal %99 {approx = true} : vector<2x8x1xf32> -> vector<2x8x1xf32>
    %101 = vector.broadcast %100 : vector<2x8x1xf32> to vector<2x8x8xf32>
    %102 = arith.mulf %97, %101 : vector<2x8x8xf32>
    "tpu.trace_start"() <{level = 10 : i32, message = "bqk,bkd->bqd"}> : () -> ()
    %cst_30 = arith.constant dense<0.000000e+00> : vector<2x8x8xf32>
    %103 = tpu.matmul %102, %90, %cst_30 {dimension_numbers = #tpu.dot_dimension_numbers<[2], [1], [1], [2], [0, 0, 0, 1, 1, 2], [0], [0]>} : vector<2x8x8xf32>, vector<2x8x8xf32>, vector<2x8x8xf32> -> vector<2x8x8xf32>
    "tpu.trace_stop"() : () -> ()
    %104 = vector.shape_cast %103 : vector<2x8x8xf32> to vector<16x8xf32>
    %105 = vector.shape_cast %102 : vector<2x8x8xf32> to vector<2x1x8x8xf32>
    %106 = tpu.concatenate %41, %62, %83, %104 in 1 : vector<16x8xf32>, vector<16x8xf32>, vector<16x8xf32>, vector<16x8xf32> -> vector<16x32xf32>
    %c0_31 = arith.constant 0 : index
    %c0_32 = arith.constant 0 : index
    %107 = vector.load %arg3[%c0_31, %c0_32] : memref<32x32xf32, #tpu.memory_space<vmem>>, vector<32x32xf32>
    %cst_33 = arith.constant dense<0.000000e+00> : vector<16x32xf32>
    %108 = tpu.matmul %106, %107, %cst_33 {dimension_numbers = #tpu.dot_dimension_numbers<[1], [0], [0], [1], [0, 0, 1, 1], [], []>} : vector<16x32xf32>, vector<32x32xf32>, vector<16x32xf32> -> vector<16x32xf32>
    %c0_34 = arith.constant 0 : index
    %c0_35 = arith.constant 0 : index
    %109 = vector.load %arg4[%c0_34, %c0_35] : memref<1x32xf32, #tpu.memory_space<vmem>>, vector<1x32xf32>
    %110 = vector.broadcast %109 : vector<1x32xf32> to vector<16x32xf32>
    %111 = arith.addf %108, %110 : vector<16x32xf32>
    %112 = vector.shape_cast %111 : vector<16x32xf32> to vector<2x8x32xf32>
    %c0_36 = arith.constant 0 : index
    %c0_37 = arith.constant 0 : index
    %c0_38 = arith.constant 0 : index
    %113 = vector.load %arg8[%c0_36, %c0_37, %c0_38] : memref<2x8x32xf32, #tpu.memory_space<vmem>>, vector<2x8x32xf32>
    tpu.vector_store %arg8[%c0_36, %c0_37, %c0_38], %112 {strides = array<i32>} : memref<2x8x32xf32, #tpu.memory_space<vmem>>, vector<2x8x32xf32>,
    %114 = tpu.concatenate %42, %63, %84, %105 in 1 : vector<2x1x8x8xf32>, vector<2x1x8x8xf32>, vector<2x1x8x8xf32>, vector<2x1x8x8xf32> -> vector<2x4x8x8xf32>
    %c0_39 = arith.constant 0 : index
    %c0_40 = arith.constant 0 : index
    %c0_41 = arith.constant 0 : index
    %c0_42 = arith.constant 0 : index
    %115 = vector.load %arg9[%c0_39, %c0_40, %c0_41, %c0_42] : memref<2x4x8x8xf32, #tpu.memory_space<vmem>>, vector<2x4x8x8xf32>
    tpu.vector_store %arg9[%c0_39, %c0_40, %c0_41, %c0_42], %114 {strides = array<i32>} : memref<2x4x8x8xf32, #tpu.memory_space<vmem>>, vector<2x4x8x8xf32>,
    return
  }
}

</mosaic_0001>

<llo_original>
// kernel: tpu_custom_call.1
$region0: #{tpu_custom_call.1}
  #allocation0 [shape = 'u32[]', space=smem, size = 0x4, offset = 0x4, fixed_abs, tag = 'smem constant byte address 0x4 - core index']
  #allocation1 [shape = 'u32[144,128]{1,0:T(1,128)}', space=vmem, size = 0x12000, scoped, tag = 'internal scratch']
  %s0 = inlined_call_operand.hbm [shape: f32[2,8,32], index: 0, kind: input, shape index: {}]
  %s1 = inlined_call_operand.hbm [shape: f32[32,96], index: 1, kind: input, shape index: {}]
  %s2 = inlined_call_operand.vmem [shape: f32[1,96], index: 2, kind: input, shape index: {}]
  %s3 = inlined_call_operand.hbm [shape: f32[32,32], index: 3, kind: input, shape index: {}]
  %s4 = inlined_call_operand.vmem [shape: f32[1,32], index: 4, kind: input, shape index: {}]
  %s5 = inlined_call_operand.vmem [shape: f32[1,32], index: 5, kind: input, shape index: {}]
  %s6 = inlined_call_operand.vmem [shape: f32[1,32], index: 6, kind: input, shape index: {}]
  %s7 = inlined_call_operand.vmem [shape: f32[2,1,8,8], index: 7, kind: input, shape index: {}]
  %s8 = inlined_call_operand.hbm [shape: f32[2,8,32], index: 8, kind: output, shape index: {0}]
  %s9 = inlined_call_operand.hbm [shape: f32[2,4,8,8], index: 9, kind: output, shape index: {1}]
  %10 = xla_tuple %s8, %s9
  %s11 = sld [smem:[#allocation0]]
  $region62: #{tpu_custom_call.1} parent=0
    _
  %s13 = ssub.s32 1, %s11
  %s14 = scalar_select 0, %s13, %s11
  $region1: #{tpu_custom_call.1} parent=0
    #allocation2 [shape = 'u8[8192]{0}', space=vmem, size = 0x2000, scoped, tag = 'input window, operand 0, single buffered']
    #allocation3 [shape = 's32[1]{0}', space=sflag, size = 0x4, scoped, tag = 'scoped memory for tpu_custom_call.1']
    #allocation4 [shape = 's32[1]{0}', space=sflag, size = 0x4, scoped, tag = 'scoped memory for tpu_custom_call.1']
    #allocation5 [shape = 'u8[16384]{0}', space=vmem, size = 0x4000, scoped, tag = 'input window, operand 1, single buffered']
    #allocation6 [shape = 's32[1]{0}', space=sflag, size = 0x4, scoped, tag = 'scoped memory for tpu_custom_call.1']
    #allocation7 [shape = 'u8[16384]{0}', space=vmem, size = 0x4000, scoped, tag = 'input window, operand 3, single buffered']
    #allocation8 [shape = 'u8[8192]{0}', space=vmem, size = 0x2000, scoped, tag = 'output window, operand 0, single buffered']
    #allocation9 [shape = 'u8[32768]{0}', space=vmem, size = 0x8000, scoped, tag = 'output window, operand 1, single buffered']
    #allocation10 [shape = 's32[1]{0}', space=sflag, size = 0x4, scoped, tag = 'scoped memory for tpu_custom_call.1']
    %15 = vsyncpa [#allocation3], 0
    %16 = vsyncpa [#allocation6], 0
    %17 = vsyncpa [#allocation4], 0
    %18 = vsyncpa [#allocation10], 0
    // Predicated region
    $region2: #{tpu_custom_call.1} parent=1 // pred_check
      _
    $region3: #{tpu_custom_call.1} parent=1 // pred_check_branch
      %20 = sbr.rel (0) target = $region5
    $region4: #{tpu_custom_call.1} parent=1 // pred_region
      %s22 = ssub.s32 256, 256
      %23 = vsyncadd [#allocation3], %s22
      %s24 = sshll.u32 [#allocation2], 4
      %s25 = int_to_ptr.vmem [resolvable:$true] %s24
      %30 = dma.hbm_to_vmem [thread:$0]  %s0, 256, %s25, [#allocation3], 128, 128, 8
    $region5: #{tpu_custom_call.1} parent=1 // pred_fallthru
      _
    // Predicated region
    $region6: #{tpu_custom_call.1} parent=1 // pred_check
      _
    $region7: #{tpu_custom_call.1} parent=1 // pred_check_branch
      %32 = sbr.rel (0) target = $region9
    $region8: #{tpu_custom_call.1} parent=1 // pred_region
      %s34 = ssub.s32 512, 512
      %35 = vsyncadd [#allocation6], %s34
      %s36 = sshll.u32 [#allocation5], 4
      %s37 = int_to_ptr.vmem [resolvable:$true] %s36
      %42 = dma.hbm_to_vmem [thread:$0]  %s1, 512, %s37, [#allocation6], 128, 128, 8
    $region9: #{tpu_custom_call.1} parent=1 // pred_fallthru
      _
    // Predicated region
    $region10: #{tpu_custom_call.1} parent=1 // pred_check
      _
    $region11: #{tpu_custom_call.1} parent=1 // pred_check_branch
      %44 = sbr.rel (0) target = $region13
    $region12: #{tpu_custom_call.1} parent=1 // pred_region
      _
    $region13: #{tpu_custom_call.1} parent=1 // pred_fallthru
      _
    // Predicated region
    $region14: #{tpu_custom_call.1} parent=1 // pred_check
      _
    $region15: #{tpu_custom_call.1} parent=1 // pred_check_branch
      %46 = sbr.rel (0) target = $region17
    $region16: #{tpu_custom_call.1} parent=1 // pred_region
      %s48 = ssub.s32 512, 512
      %49 = vsyncadd [#allocation6], %s48
      %s50 = sshll.u32 [#allocation7], 4
      %s51 = int_to_ptr.vmem [resolvable:$true] %s50
      %56 = dma.hbm_to_vmem [thread:$0]  %s3, 512, %s51, [#allocation6], 128, 128, 8
    $region17: #{tpu_custom_call.1} parent=1 // pred_fallthru
      _
    // Predicated region
    $region18: #{tpu_custom_call.1} parent=1 // pred_check
      _
    $region19: #{tpu_custom_call.1} parent=1 // pred_check_branch
      %58 = sbr.rel (0) target = $region21
    $region20: #{tpu_custom_call.1} parent=1 // pred_region
      _
    $region21: #{tpu_custom_call.1} parent=1 // pred_fallthru
      _
    // Predicated region
    $region22: #{tpu_custom_call.1} parent=1 // pred_check
      _
    $region23: #{tpu_custom_call.1} parent=1 // pred_check_branch
      %60 = sbr.rel (0) target = $region25
    $region24: #{tpu_custom_call.1} parent=1 // pred_region
      _
    $region25: #{tpu_custom_call.1} parent=1 // pred_fallthru
      _
    // Predicated region
    $region26: #{tpu_custom_call.1} parent=1 // pred_check
      _
    $region27: #{tpu_custom_call.1} parent=1 // pred_check_branch
      %62 = sbr.rel (0) target = $region29
    $region28: #{tpu_custom_call.1} parent=1 // pred_region
      _
    $region29: #{tpu_custom_call.1} parent=1 // pred_fallthru
      _
    // Predicated region
    $region30: #{tpu_custom_call.1} parent=1 // pred_check
      _
    $region31: #{tpu_custom_call.1} parent=1 // pred_check_branch
      %64 = sbr.rel (0) target = $region33
    $region32: #{tpu_custom_call.1} parent=1 // pred_region
      _
    $region33: #{tpu_custom_call.1} parent=1 // pred_fallthru
      _
    // Predicated region
    $region34: #{tpu_custom_call.1} parent=1 // pred_check
      _
    $region35: #{tpu_custom_call.1} parent=1 // pred_check_branch
      %66 = sbr.rel (0) target = $region37
    $region36: #{tpu_custom_call.1} parent=1 // pred_region
      %67 = dma.done [#allocation3], 256
    $region37: #{tpu_custom_call.1} parent=1 // pred_fallthru
      _
    // Predicated region
    $region38: #{tpu_custom_call.1} parent=1 // pred_check
      _
    $region39: #{tpu_custom_call.1} parent=1 // pred_check_branch
      %69 = sbr.rel (0) target = $region41
    $region40: #{tpu_custom_call.1} parent=1 // pred_region
      %70 = dma.done [#allocation6], 512
    $region41: #{tpu_custom_call.1} parent=1 // pred_fallthru
      _
    // Predicated region
    $region42: #{tpu_custom_call.1} parent=1 // pred_check
      _
    $region43: #{tpu_custom_call.1} parent=1 // pred_check_branch
      %72 = sbr.rel (0) target = $region45
    $region44: #{tpu_custom_call.1} parent=1 // pred_region
      %73 = dma.done [#allocation6], 512
    $region45: #{tpu_custom_call.1} parent=1 // pred_fallthru
      _
    %v74 = vld [vmem:[#allocation2] sm:$0xff]
    %v75 = vld [vmem:[#allocation2 + $0x8] sm:$0xff]
    %v76 = vld [vmem:[#allocation5] sm:$0xff]
    %v77 = vld [vmem:[#allocation5 + $0x8] sm:$0xff]
    %v78 = vld [vmem:[#allocation5 + $0x10] sm:$0xff]
    %v79 = vld [vmem:[#allocation5 + $0x18] sm:$0xff]
    %v80 = vld [vmem:[%s2] sm:$0x1]
    %v82 = vlaneseq
    %v83 = vshrl.u32 %v82, 7
    %v84 = vsub.s32 0, %v83
    %v85 = vrot.slane %v80, %v84
    %vm87 = vcmask 261120
    %v89 = vsel %vm87, %v74, 0
    %v92 = vsel %vm87, %v75, 0
    %94 = vmatprep.subr.mxu0 0.0
    %95 = vmatpush1.msra.mxu0 %v76
    %96 = vmatprep.subr.mxu0 0.0
    %97 = vmatpush1.msra.mxu0 %v77
    %98 = vmatprep.subr.mxu0 0.0
    %99 = vmatpush1.msra.mxu0 %v78
    %100 = vmatprep.subr.mxu0 0.0
    %101 = vmatpush1.msra.mxu0 %v79
    %102 = vmatprep.subr.mxu0 0.0
    %103 = vmatpush1.msra.mxu0 0.0
    %104 = vmatprep.subr.mxu0 0.0
    %105 = vmatpush1.msra.mxu0 0.0
    %106 = vmatprep.subr.mxu0 0.0
    %107 = vmatpush1.msra.mxu0 0.0
    %108 = vmatprep.subr.mxu0 0.0
    %109 = vmatpush1.msra.mxu0 0.0
    %110 = vmatprep.subr.mxu0 0.0
    %111 = vmatpush1.msra.mxu0 0.0
    %112 = vmatprep.subr.mxu0 0.0
    %113 = vmatpush1.msra.mxu0 0.0
    %114 = vmatprep.subr.mxu0 0.0
    %115 = vmatpush1.msra.mxu0 0.0
    %116 = vmatprep.subr.mxu0 0.0
    %117 = vmatpush1.msra.mxu0 0.0
    %118 = vmatprep.subr.mxu0 0.0
    %119 = vmatpush1.msra.mxu0 0.0
    %120 = vmatprep.subr.mxu0 0.0
    %121 = vmatpush1.msra.mxu0 0.0
    %122 = vmatprep.subr.mxu0 0.0
    %123 = vmatpush1.msra.mxu0 0.0
    %124 = vmatprep.subr.mxu0 0.0
    %125 = vmatpush1.msra.mxu0 0.0
    %126 = vmatprep.subr.mxu0 0.0
    %127 = vmatpush1.msra.mxu0 0.0
    %128 = vmatprep.subr.mxu0 0.0
    %129 = vmatpush1.msra.mxu0 0.0
    %130 = vmatprep.subr.mxu0 0.0
    %131 = vmatpush1.msra.mxu0 0.0
    %132 = vmatprep.subr.mxu0 0.0
    %133 = vmatpush1.msra.mxu0 0.0
    %134 = vmatprep.subr.mxu0 0.0
    %135 = vmatpush1.msra.mxu0 0.0
    %136 = vmatprep.subr.mxu0 0.0
    %137 = vmatpush1.msra.mxu0 0.0
    %138 = vmatprep.subr.mxu0 0.0
    %139 = vmatpush1.msra.mxu0 0.0
    %140 = vmatprep.subr.mxu0 0.0
    %141 = vmatpush1.msra.mxu0 0.0
    %142 = vmatprep.subr.mxu0 0.0
    %143 = vmatpush1.msra.mxu0 0.0
    %144 = vmatprep.subr.mxu0 0.0
    %145 = vmatpush1.msra.mxu0 0.0
    %146 = vmatprep.subr.mxu0 0.0
    %147 = vmatpush1.msra.mxu0 0.0
    %148 = vmatprep.subr.mxu0 0.0
    %149 = vmatpush1.msra.mxu0 0.0
    %150 = vmatprep.subr.mxu0 0.0
    %151 = vmatpush1.msra.mxu0 0.0
    %152 = vmatprep.subr.mxu0 0.0
    %153 = vmatpush1.msra.mxu0 0.0
    %154 = vmatprep.subr.mxu0 0.0
    %155 = vmatpush1.msra.mxu0 0.0
    %156 = vmatprep.subr.mxu0 0.0
    %157 = vmatpush1.msra.mxu0 0.0
    %158 = vmatprep.mubr.f32.mxu0 0.0
    %159 = vmatmul.mubr.f32.gmra.mrb[0].mxu0 %v89
    %v160 = vpop.f32.mrb[0].mxu0
    %v161 = vadd.f32 %v85, %v160
    %v162 = vpop.f32.mrb[0].mxu0
    %163 = vmatprep.mubr.f32.mxu0 0.0
    %164 = vmatmul.mubr.f32.gmra.mrb[0].mxu0 %v92
    %v165 = vpop.f32.mrb[0].mxu0
    %v166 = vadd.f32 %v85, %v165
    %v167 = vpop.f32.mrb[0].mxu0
    %168 = vdwg.mxu0
    %v169 = vld [vmem:[%s5] sm:$0x1]
    %v170 = vld [vmem:[%s6] sm:$0x1]
    %v171 = vmul.f32 %v169, 0.35355338
    %v173 = vlaneseq
    %v174 = vshrl.u32 %v173, 7
    %v175 = vsub.s32 0, %v174
    %v176 = vrot.slane %v171, %v175
    %v178 = vmul.f32 %v161, %v176
    %v179 = vmul.f32 %v166, %v176
    %v181 = vlaneseq
    %v182 = vshrl.u32 %v181, 7
    %v183 = vsub.s32 0, %v182
    %v184 = vrot.slane %v169, %v183
    %185 = vrot.lane.b32.xlu0 %v184, 32
    %v186 = vpop.permute.xlu0 %185
    %v188 = vmul.f32 %v161, %v186
    %v189 = vmul.f32 %v166, %v186
    %v191 = vlaneseq
    %v192 = vshrl.u32 %v191, 7
    %v193 = vsub.s32 0, %v192
    %v194 = vrot.slane %v170, %v193
    %195 = vrot.lane.b32.xlu0 %v194, 64
    %v196 = vpop.permute.xlu0 %195
    %v198 = vmul.f32 %v161, %v196
    %v199 = vmul.f32 %v166, %v196
    %v200 = vld [vmem:[%s7] sm:$0xff]
    %v201 = vld [vmem:[%s7 + $0x8] sm:$0xff]
    %203 = vrot.lane.b32.xlu0 %v188, 96
    %v204 = vpop.permute.xlu0 %203
    %vm205 = vcmask 64512
    %v207 = vsel %vm205, %v178, 0
    %v209 = vsel %vm205, %v204, 0
    %211 = vmatprep.subr.mxu0 0.0
    %212 = vmatpush1.xpose.msra.mxu0 %v209
    %213 = vmatprep.subr.mxu0 0.0
    %214 = vmatpush1.xpose.msra.mxu0 0.0
    %215 = vmatprep.subr.mxu0 0.0
    %216 = vmatpush1.xpose.msra.mxu0 0.0
    %217 = vmatprep.subr.mxu0 0.0
    %218 = vmatpush1.xpose.msra.mxu0 0.0
    %219 = vmatprep.subr.mxu0 0.0
    %220 = vmatpush1.xpose.msra.mxu0 0.0
    %221 = vmatprep.subr.mxu0 0.0
    %222 = vmatpush1.xpose.msra.mxu0 0.0
    %223 = vmatprep.subr.mxu0 0.0
    %224 = vmatpush1.xpose.msra.mxu0 0.0
    %225 = vmatprep.subr.mxu0 0.0
    %226 = vmatpush1.xpose.msra.mxu0 0.0
    %227 = vmatprep.subr.mxu0 0.0
    %228 = vmatpush1.xpose.msra.mxu0 0.0
    %229 = vmatprep.subr.mxu0 0.0
    %230 = vmatpush1.xpose.msra.mxu0 0.0
    %231 = vmatprep.subr.mxu0 0.0
    %232 = vmatpush1.xpose.msra.mxu0 0.0
    %233 = vmatprep.subr.mxu0 0.0
    %234 = vmatpush1.xpose.msra.mxu0 0.0
    %235 = vmatprep.subr.mxu0 0.0
    %236 = vmatpush1.xpose.msra.mxu0 0.0
    %237 = vmatprep.subr.mxu0 0.0
    %238 = vmatpush1.xpose.msra.mxu0 0.0
    %239 = vmatprep.subr.mxu0 0.0
    %240 = vmatpush1.xpose.msra.mxu0 0.0
    %241 = vmatprep.subr.mxu0 0.0
    %242 = vmatpush1.xpose.msra.mxu0 0.0
    %243 = vmatprep.subr.mxu0 0.0
    %244 = vmatpush1.xpose.msra.mxu0 0.0
    %245 = vmatprep.subr.mxu0 0.0
    %246 = vmatpush1.xpose.msra.mxu0 0.0
    %247 = vmatprep.subr.mxu0 0.0
    %248 = vmatpush1.xpose.msra.mxu0 0.0
    %249 = vmatprep.subr.mxu0 0.0
    %250 = vmatpush1.xpose.msra.mxu0 0.0
    %251 = vmatprep.subr.mxu0 0.0
    %252 = vmatpush1.xpose.msra.mxu0 0.0
    %253 = vmatprep.subr.mxu0 0.0
    %254 = vmatpush1.xpose.msra.mxu0 0.0
    %255 = vmatprep.subr.mxu0 0.0
    %256 = vmatpush1.xpose.msra.mxu0 0.0
    %257 = vmatprep.subr.mxu0 0.0
    %258 = vmatpush1.xpose.msra.mxu0 0.0
    %259 = vmatprep.subr.mxu0 0.0
    %260 = vmatpush1.xpose.msra.mxu0 0.0
    %261 = vmatprep.subr.mxu0 0.0
    %262 = vmatpush1.xpose.msra.mxu0 0.0
    %263 = vmatprep.subr.mxu0 0.0
    %264 = vmatpush1.xpose.msra.mxu0 0.0
    %265 = vmatprep.subr.mxu0 0.0
    %266 = vmatpush1.xpose.msra.mxu0 0.0
    %267 = vmatprep.subr.mxu0 0.0
    %268 = vmatpush1.xpose.msra.mxu0 0.0
    %269 = vmatprep.subr.mxu0 0.0
    %270 = vmatpush1.xpose.msra.mxu0 0.0
    %271 = vmatprep.subr.mxu0 0.0
    %272 = vmatpush1.xpose.msra.mxu0 0.0
    %273 = vmatprep.subr.mxu0 0.0
    %274 = vmatpush1.xpose.msra.mxu0 0.0
    %275 = vmatprep.mubr.f32.mxu0 0.0
    %276 = vmatmul.mubr.f32.gmra.mrb[0].mxu0 %v207
    %v277 = vpop.f32.mrb[0].mxu0
    %v278 = vadd.f32 %v200, %v277
    %v279 = vpop.f32.mrb[0].mxu0
    %280 = vdwg.mxu0
    %282 = vrot.lane.b32.xlu0 %v189, 96
    %v283 = vpop.permute.xlu0 %282
    %v285 = vsel %vm205, %v179, 0
    %v287 = vsel %vm205, %v283, 0
    %289 = vmatprep.subr.mxu0 0.0
    %290 = vmatpush1.xpose.msra.mxu0 %v287
    %291 = vmatprep.subr.mxu0 0.0
    %292 = vmatpush1.xpose.msra.mxu0 0.0
    %293 = vmatprep.subr.mxu0 0.0
    %294 = vmatpush1.xpose.msra.mxu0 0.0
    %295 = vmatprep.subr.mxu0 0.0
    %296 = vmatpush1.xpose.msra.mxu0 0.0
    %297 = vmatprep.subr.mxu0 0.0
    %298 = vmatpush1.xpose.msra.mxu0 0.0
    %299 = vmatprep.subr.mxu0 0.0
    %300 = vmatpush1.xpose.msra.mxu0 0.0
    %301 = vmatprep.subr.mxu0 0.0
    %302 = vmatpush1.xpose.msra.mxu0 0.0
    %303 = vmatprep.subr.mxu0 0.0
    %304 = vmatpush1.xpose.msra.mxu0 0.0
    %305 = vmatprep.subr.mxu0 0.0
    %306 = vmatpush1.xpose.msra.mxu0 0.0
    %307 = vmatprep.subr.mxu0 0.0
    %308 = vmatpush1.xpose.msra.mxu0 0.0
    %309 = vmatprep.subr.mxu0 0.0
    %310 = vmatpush1.xpose.msra.mxu0 0.0
    %311 = vmatprep.subr.mxu0 0.0
    %312 = vmatpush1.xpose.msra.mxu0 0.0
    %313 = vmatprep.subr.mxu0 0.0
    %314 = vmatpush1.xpose.msra.mxu0 0.0
    %315 = vmatprep.subr.mxu0 0.0
    %316 = vmatpush1.xpose.msra.mxu0 0.0
    %317 = vmatprep.subr.mxu0 0.0
    %318 = vmatpush1.xpose.msra.mxu0 0.0
    %319 = vmatprep.subr.mxu0 0.0
    %320 = vmatpush1.xpose.msra.mxu0 0.0
    %321 = vmatprep.subr.mxu0 0.0
    %322 = vmatpush1.xpose.msra.mxu0 0.0
    %323 = vmatprep.subr.mxu0 0.0
    %324 = vmatpush1.xpose.msra.mxu0 0.0
    %325 = vmatprep.subr.mxu0 0.0
    %326 = vmatpush1.xpose.msra.mxu0 0.0
    %327 = vmatprep.subr.mxu0 0.0
    %328 = vmatpush1.xpose.msra.mxu0 0.0
    %329 = vmatprep.subr.mxu0 0.0
    %330 = vmatpush1.xpose.msra.mxu0 0.0
    %331 = vmatprep.subr.mxu0 0.0
    %332 = vmatpush1.xpose.msra.mxu0 0.0
    %333 = vmatprep.subr.mxu0 0.0
    %334 = vmatpush1.xpose.msra.mxu0 0.0
    %335 = vmatprep.subr.mxu0 0.0
    %336 = vmatpush1.xpose.msra.mxu0 0.0
    %337 = vmatprep.subr.mxu0 0.0
    %338 = vmatpush1.xpose.msra.mxu0 0.0
    %339 = vmatprep.subr.mxu0 0.0
    %340 = vmatpush1.xpose.msra.mxu0 0.0
    %341 = vmatprep.subr.mxu0 0.0
    %342 = vmatpush1.xpose.msra.mxu0 0.0
    %343 = vmatprep.subr.mxu0 0.0
    %344 = vmatpush1.xpose.msra.mxu0 0.0
    %345 = vmatprep.subr.mxu0 0.0
    %346 = vmatpush1.xpose.msra.mxu0 0.0
    %347 = vmatprep.subr.mxu0 0.0
    %348 = vmatpush1.xpose.msra.mxu0 0.0
    %349 = vmatprep.subr.mxu0 0.0
    %350 = vmatpush1.xpose.msra.mxu0 0.0
    %351 = vmatprep.subr.mxu0 0.0
    %352 = vmatpush1.xpose.msra.mxu0 0.0
    %353 = vmatprep.mubr.f32.mxu0 0.0
    %354 = vmatmul.mubr.f32.gmra.mrb[0].mxu0 %v285
    %v355 = vpop.f32.mrb[0].mxu0
    %v356 = vadd.f32 %v201, %v355
    %v357 = vpop.f32.mrb[0].mxu0
    %358 = vdwg.mxu0
    %v359 = vsel %vm205, %v278, -inf
    %360 = vmax.xlane.f32.xlu0 %v359
    %v361 = vpop.xlane.xlu0 %360
    %v362 = vsel %vm205, %v356, -inf
    %363 = vmax.xlane.f32.xlu0 %v362
    %v364 = vpop.xlane.xlu0 %363
    %v365 = vsub.f32 %v278, %v361
    %v366 = vsub.f32 %v356, %v364
    %v367 = vmul.f32 %v365, 1.442695
    %v368 = vpow.pop %v367
    %v369 = vmul.f32 %v366, 1.442695
    %v370 = vpow.pop %v369
    %v371 = vsel %vm205, %v368, 0.0
    %372 = vadd.xlane.f32.xlu0 %v371
    %v373 = vpop.xlane.xlu0 %372
    %v374 = vsel %vm205, %v370, 0.0
    %375 = vadd.xlane.f32.xlu0 %v374
    %v376 = vpop.xlane.xlu0 %375
    %v377 = vrcp.pop %v373
    %v378 = vrcp.pop %v376
    %v379 = vmul.f32 %v368, %v377
    %v380 = vmul.f32 %v370, %v378
    %382 = vrot.lane.b32.xlu0 %v198, 64
    %v383 = vpop.permute.xlu0 %382
    %v386 = vsel %vm205, %v379, 0
    %388 = vmatprep.subr.mxu0 0.0
    %389 = vmatpush1.msra.mxu0 %v383
    %390 = vmatprep.subr.mxu0 0.0
    %391 = vmatpush1.msra.mxu0 0.0
    %392 = vmatprep.subr.mxu0 0.0
    %393 = vmatpush1.msra.mxu0 0.0
    %394 = vmatprep.subr.mxu0 0.0
    %395 = vmatpush1.msra.mxu0 0.0
    %396 = vmatprep.subr.mxu0 0.0
    %397 = vmatpush1.msra.mxu0 0.0
    %398 = vmatprep.subr.mxu0 0.0
    %399 = vmatpush1.msra.mxu0 0.0
    %400 = vmatprep.subr.mxu0 0.0
    %401 = vmatpush1.msra.mxu0 0.0
    %402 = vmatprep.subr.mxu0 0.0
    %403 = vmatpush1.msra.mxu0 0.0
    %404 = vmatprep.subr.mxu0 0.0
    %405 = vmatpush1.msra.mxu0 0.0
    %406 = vmatprep.subr.mxu0 0.0
    %407 = vmatpush1.msra.mxu0 0.0
    %408 = vmatprep.subr.mxu0 0.0
    %409 = vmatpush1.msra.mxu0 0.0
    %410 = vmatprep.subr.mxu0 0.0
    %411 = vmatpush1.msra.mxu0 0.0
    %412 = vmatprep.subr.mxu0 0.0
    %413 = vmatpush1.msra.mxu0 0.0
    %414 = vmatprep.subr.mxu0 0.0
    %415 = vmatpush1.msra.mxu0 0.0
    %416 = vmatprep.subr.mxu0 0.0
    %417 = vmatpush1.msra.mxu0 0.0
    %418 = vmatprep.subr.mxu0 0.0
    %419 = vmatpush1.msra.mxu0 0.0
    %420 = vmatprep.subr.mxu0 0.0
    %421 = vmatpush1.msra.mxu0 0.0
    %422 = vmatprep.subr.mxu0 0.0
    %423 = vmatpush1.msra.mxu0 0.0
    %424 = vmatprep.subr.mxu0 0.0
    %425 = vmatpush1.msra.mxu0 0.0
    %426 = vmatprep.subr.mxu0 0.0
    %427 = vmatpush1.msra.mxu0 0.0
    %428 = vmatprep.subr.mxu0 0.0
    %429 = vmatpush1.msra.mxu0 0.0
    %430 = vmatprep.subr.mxu0 0.0
    %431 = vmatpush1.msra.mxu0 0.0
    %432 = vmatprep.subr.mxu0 0.0
    %433 = vmatpush1.msra.mxu0 0.0
    %434 = vmatprep.subr.mxu0 0.0
    %435 = vmatpush1.msra.mxu0 0.0
    %436 = vmatprep.subr.mxu0 0.0
    %437 = vmatpush1.msra.mxu0 0.0
    %438 = vmatprep.subr.mxu0 0.0
    %439 = vmatpush1.msra.mxu0 0.0
    %440 = vmatprep.subr.mxu0 0.0
    %441 = vmatpush1.msra.mxu0 0.0
    %442 = vmatprep.subr.mxu0 0.0
    %443 = vmatpush1.msra.mxu0 0.0
    %444 = vmatprep.subr.mxu0 0.0
    %445 = vmatpush1.msra.mxu0 0.0
    %446 = vmatprep.subr.mxu0 0.0
    %447 = vmatpush1.msra.mxu0 0.0
    %448 = vmatprep.subr.mxu0 0.0
    %449 = vmatpush1.msra.mxu0 0.0
    %450 = vmatprep.subr.mxu0 0.0
    %451 = vmatpush1.msra.mxu0 0.0
    %452 = vmatprep.mubr.f32.mxu0 0.0
    %453 = vmatmul.mubr.f32.gmra.mrb[0].mxu0 %v386
    %v454 = vpop.f32.mrb[0].mxu0
    %v455 = vadd.f32 0.0, %v454
    %v456 = vpop.f32.mrb[0].mxu0
    %457 = vdwg.mxu0
    %459 = vrot.lane.b32.xlu0 %v199, 64
    %v460 = vpop.permute.xlu0 %459
    %v463 = vsel %vm205, %v380, 0
    %465 = vmatprep.subr.mxu0 0.0
    %466 = vmatpush1.msra.mxu0 %v460
    %467 = vmatprep.subr.mxu0 0.0
    %468 = vmatpush1.msra.mxu0 0.0
    %469 = vmatprep.subr.mxu0 0.0
    %470 = vmatpush1.msra.mxu0 0.0
    %471 = vmatprep.subr.mxu0 0.0
    %472 = vmatpush1.msra.mxu0 0.0
    %473 = vmatprep.subr.mxu0 0.0
    %474 = vmatpush1.msra.mxu0 0.0
    %475 = vmatprep.subr.mxu0 0.0
    %476 = vmatpush1.msra.mxu0 0.0
    %477 = vmatprep.subr.mxu0 0.0
    %478 = vmatpush1.msra.mxu0 0.0
    %479 = vmatprep.subr.mxu0 0.0
    %480 = vmatpush1.msra.mxu0 0.0
    %481 = vmatprep.subr.mxu0 0.0
    %482 = vmatpush1.msra.mxu0 0.0
    %483 = vmatprep.subr.mxu0 0.0
    %484 = vmatpush1.msra.mxu0 0.0
    %485 = vmatprep.subr.mxu0 0.0
    %486 = vmatpush1.msra.mxu0 0.0
    %487 = vmatprep.subr.mxu0 0.0
    %488 = vmatpush1.msra.mxu0 0.0
    %489 = vmatprep.subr.mxu0 0.0
    %490 = vmatpush1.msra.mxu0 0.0
    %491 = vmatprep.subr.mxu0 0.0
    %492 = vmatpush1.msra.mxu0 0.0
    %493 = vmatprep.subr.mxu0 0.0
    %494 = vmatpush1.msra.mxu0 0.0
    %495 = vmatprep.subr.mxu0 0.0
    %496 = vmatpush1.msra.mxu0 0.0
    %497 = vmatprep.subr.mxu0 0.0
    %498 = vmatpush1.msra.mxu0 0.0
    %499 = vmatprep.subr.mxu0 0.0
    %500 = vmatpush1.msra.mxu0 0.0
    %501 = vmatprep.subr.mxu0 0.0
    %502 = vmatpush1.msra.mxu0 0.0
    %503 = vmatprep.subr.mxu0 0.0
    %504 = vmatpush1.msra.mxu0 0.0
    %505 = vmatprep.subr.mxu0 0.0
    %506 = vmatpush1.msra.mxu0 0.0
    %507 = vmatprep.subr.mxu0 0.0
    %508 = vmatpush1.msra.mxu0 0.0
    %509 = vmatprep.subr.mxu0 0.0
    %510 = vmatpush1.msra.mxu0 0.0
    %511 = vmatprep.subr.mxu0 0.0
    %512 = vmatpush1.msra.mxu0 0.0
    %513 = vmatprep.subr.mxu0 0.0
    %514 = vmatpush1.msra.mxu0 0.0
    %515 = vmatprep.subr.mxu0 0.0
    %516 = vmatpush1.msra.mxu0 0.0
    %517 = vmatprep.subr.mxu0 0.0
    %518 = vmatpush1.msra.mxu0 0.0
    %519 = vmatprep.subr.mxu0 0.0
    %520 = vmatpush1.msra.mxu0 0.0
    %521 = vmatprep.subr.mxu0 0.0
    %522 = vmatpush1.msra.mxu0 0.0
    %523 = vmatprep.subr.mxu0 0.0
    %524 = vmatpush1.msra.mxu0 0.0
    %525 = vmatprep.subr.mxu0 0.0
    %526 = vmatpush1.msra.mxu0 0.0
    %527 = vmatprep.subr.mxu0 0.0
    %528 = vmatpush1.msra.mxu0 0.0
    %529 = vmatprep.mubr.f32.mxu0 0.0
    %530 = vmatmul.mubr.f32.gmra.mrb[0].mxu0 %v463
    %v531 = vpop.f32.mrb[0].mxu0
    %v532 = vadd.f32 0.0, %v531
    %v533 = vpop.f32.mrb[0].mxu0
    %534 = vdwg.mxu0
    %535 = vrot.lane.b32.xlu0 %v178, 120
    %v536 = vpop.permute.xlu0 %535
    %537 = vrot.lane.b32.xlu0 %v188, 88
    %v538 = vpop.permute.xlu0 %537
    %v539 = vsel %vm205, %v536, 0
    %v541 = vsel %vm205, %v538, 0
    %543 = vmatprep.subr.mxu0 0.0
    %544 = vmatpush1.xpose.msra.mxu0 %v541
    %545 = vmatprep.subr.mxu0 0.0
    %546 = vmatpush1.xpose.msra.mxu0 0.0
    %547 = vmatprep.subr.mxu0 0.0
    %548 = vmatpush1.xpose.msra.mxu0 0.0
    %549 = vmatprep.subr.mxu0 0.0
    %550 = vmatpush1.xpose.msra.mxu0 0.0
    %551 = vmatprep.subr.mxu0 0.0
    %552 = vmatpush1.xpose.msra.mxu0 0.0
    %553 = vmatprep.subr.mxu0 0.0
    %554 = vmatpush1.xpose.msra.mxu0 0.0
    %555 = vmatprep.subr.mxu0 0.0
    %556 = vmatpush1.xpose.msra.mxu0 0.0
    %557 = vmatprep.subr.mxu0 0.0
    %558 = vmatpush1.xpose.msra.mxu0 0.0
    %559 = vmatprep.subr.mxu0 0.0
    %560 = vmatpush1.xpose.msra.mxu0 0.0
    %561 = vmatprep.subr.mxu0 0.0
    %562 = vmatpush1.xpose.msra.mxu0 0.0
    %563 = vmatprep.subr.mxu0 0.0
    %564 = vmatpush1.xpose.msra.mxu0 0.0
    %565 = vmatprep.subr.mxu0 0.0
    %566 = vmatpush1.xpose.msra.mxu0 0.0
    %567 = vmatprep.subr.mxu0 0.0
    %568 = vmatpush1.xpose.msra.mxu0 0.0
    %569 = vmatprep.subr.mxu0 0.0
    %570 = vmatpush1.xpose.msra.mxu0 0.0
    %571 = vmatprep.subr.mxu0 0.0
    %572 = vmatpush1.xpose.msra.mxu0 0.0
    %573 = vmatprep.subr.mxu0 0.0
    %574 = vmatpush1.xpose.msra.mxu0 0.0
    %575 = vmatprep.subr.mxu0 0.0
    %576 = vmatpush1.xpose.msra.mxu0 0.0
    %577 = vmatprep.subr.mxu0 0.0
    %578 = vmatpush1.xpose.msra.mxu0 0.0
    %579 = vmatprep.subr.mxu0 0.0
    %580 = vmatpush1.xpose.msra.mxu0 0.0
    %581 = vmatprep.subr.mxu0 0.0
    %582 = vmatpush1.xpose.msra.mxu0 0.0
    %583 = vmatprep.subr.mxu0 0.0
    %584 = vmatpush1.xpose.msra.mxu0 0.0
    %585 = vmatprep.subr.mxu0 0.0
    %586 = vmatpush1.xpose.msra.mxu0 0.0
    %587 = vmatprep.subr.mxu0 0.0
    %588 = vmatpush1.xpose.msra.mxu0 0.0
    %589 = vmatprep.subr.mxu0 0.0
    %590 = vmatpush1.xpose.msra.mxu0 0.0
    %591 = vmatprep.subr.mxu0 0.0
    %592 = vmatpush1.xpose.msra.mxu0 0.0
    %593 = vmatprep.subr.mxu0 0.0
    %594 = vmatpush1.xpose.msra.mxu0 0.0
    %595 = vmatprep.subr.mxu0 0.0
    %596 = vmatpush1.xpose.msra.mxu0 0.0
    %597 = vmatprep.subr.mxu0 0.0
    %598 = vmatpush1.xpose.msra.mxu0 0.0
    %599 = vmatprep.subr.mxu0 0.0
    %600 = vmatpush1.xpose.msra.mxu0 0.0
    %601 = vmatprep.subr.mxu0 0.0
    %602 = vmatpush1.xpose.msra.mxu0 0.0
    %603 = vmatprep.subr.mxu0 0.0
    %604 = vmatpush1.xpose.msra.mxu0 0.0
    %605 = vmatprep.subr.mxu0 0.0
    %606 = vmatpush1.xpose.msra.mxu0 0.0
    %607 = vmatprep.mubr.f32.mxu0 0.0
    %608 = vmatmul.mubr.f32.gmra.mrb[0].mxu0 %v539
    %v609 = vpop.f32.mrb[0].mxu0
    %v610 = vadd.f32 %v200, %v609
    %v611 = vpop.f32.mrb[0].mxu0
    %612 = vdwg.mxu0
    %613 = vrot.lane.b32.xlu0 %v179, 120
    %v614 = vpop.permute.xlu0 %613
    %615 = vrot.lane.b32.xlu0 %v189, 88
    %v616 = vpop.permute.xlu0 %615
    %v617 = vsel %vm205, %v614, 0
    %v619 = vsel %vm205, %v616, 0
    %621 = vmatprep.subr.mxu0 0.0
    %622 = vmatpush1.xpose.msra.mxu0 %v619
    %623 = vmatprep.subr.mxu0 0.0
    %624 = vmatpush1.xpose.msra.mxu0 0.0
    %625 = vmatprep.subr.mxu0 0.0
    %626 = vmatpush1.xpose.msra.mxu0 0.0
    %627 = vmatprep.subr.mxu0 0.0
    %628 = vmatpush1.xpose.msra.mxu0 0.0
    %629 = vmatprep.subr.mxu0 0.0
    %630 = vmatpush1.xpose.msra.mxu0 0.0
    %631 = vmatprep.subr.mxu0 0.0
    %632 = vmatpush1.xpose.msra.mxu0 0.0
    %633 = vmatprep.subr.mxu0 0.0
    %634 = vmatpush1.xpose.msra.mxu0 0.0
    %635 = vmatprep.subr.mxu0 0.0
    %636 = vmatpush1.xpose.msra.mxu0 0.0
    %637 = vmatprep.subr.mxu0 0.0
    %638 = vmatpush1.xpose.msra.mxu0 0.0
    %639 = vmatprep.subr.mxu0 0.0
    %640 = vmatpush1.xpose.msra.mxu0 0.0
    %641 = vmatprep.subr.mxu0 0.0
    %642 = vmatpush1.xpose.msra.mxu0 0.0
    %643 = vmatprep.subr.mxu0 0.0
    %644 = vmatpush1.xpose.msra.mxu0 0.0
    %645 = vmatprep.subr.mxu0 0.0
    %646 = vmatpush1.xpose.msra.mxu0 0.0
    %647 = vmatprep.subr.mxu0 0.0
    %648 = vmatpush1.xpose.msra.mxu0 0.0
    %649 = vmatprep.subr.mxu0 0.0
    %650 = vmatpush1.xpose.msra.mxu0 0.0
    %651 = vmatprep.subr.mxu0 0.0
    %652 = vmatpush1.xpose.msra.mxu0 0.0
    %653 = vmatprep.subr.mxu0 0.0
    %654 = vmatpush1.xpose.msra.mxu0 0.0
    %655 = vmatprep.subr.mxu0 0.0
    %656 = vmatpush1.xpose.msra.mxu0 0.0
    %657 = vmatprep.subr.mxu0 0.0
    %658 = vmatpush1.xpose.msra.mxu0 0.0
    %659 = vmatprep.subr.mxu0 0.0
    %660 = vmatpush1.xpose.msra.mxu0 0.0
    %661 = vmatprep.subr.mxu0 0.0
    %662 = vmatpush1.xpose.msra.mxu0 0.0
    %663 = vmatprep.subr.mxu0 0.0
    %664 = vmatpush1.xpose.msra.mxu0 0.0
    %665 = vmatprep.subr.mxu0 0.0
    %666 = vmatpush1.xpose.msra.mxu0 0.0
    %667 = vmatprep.subr.mxu0 0.0
    %668 = vmatpush1.xpose.msra.mxu0 0.0
    %669 = vmatprep.subr.mxu0 0.0
    %670 = vmatpush1.xpose.msra.mxu0 0.0
    %671 = vmatprep.subr.mxu0 0.0
    %672 = vmatpush1.xpose.msra.mxu0 0.0
    %673 = vmatprep.subr.mxu0 0.0
    %674 = vmatpush1.xpose.msra.mxu0 0.0
    %675 = vmatprep.subr.mxu0 0.0
    %676 = vmatpush1.xpose.msra.mxu0 0.0
    %677 = vmatprep.subr.mxu0 0.0
    %678 = vmatpush1.xpose.msra.mxu0 0.0
    %679 = vmatprep.subr.mxu0 0.0
    %680 = vmatpush1.xpose.msra.mxu0 0.0
    %681 = vmatprep.subr.mxu0 0.0
    %682 = vmatpush1.xpose.msra.mxu0 0.0
    %683 = vmatprep.subr.mxu0 0.0
    %684 = vmatpush1.xpose.msra.mxu0 0.0
    %685 = vmatprep.mubr.f32.mxu0 0.0
    %686 = vmatmul.mubr.f32.gmra.mrb[0].mxu0 %v617
    %v687 = vpop.f32.mrb[0].mxu0
    %v688 = vadd.f32 %v201, %v687
    %v689 = vpop.f32.mrb[0].mxu0
    %690 = vdwg.mxu0
    %v691 = vsel %vm205, %v610, -inf
    %692 = vmax.xlane.f32.xlu0 %v691
    %v693 = vpop.xlane.xlu0 %692
    %v694 = vsel %vm205, %v688, -inf
    %695 = vmax.xlane.f32.xlu0 %v694
    %v696 = vpop.xlane.xlu0 %695
    %v697 = vsub.f32 %v610, %v693
    %v698 = vsub.f32 %v688, %v696
    %v699 = vmul.f32 %v697, 1.442695
    %v700 = vpow.pop %v699
    %v701 = vmul.f32 %v698, 1.442695
    %v702 = vpow.pop %v701
    %v703 = vsel %vm205, %v700, 0.0
    %704 = vadd.xlane.f32.xlu0 %v703
    %v705 = vpop.xlane.xlu0 %704
    %v706 = vsel %vm205, %v702, 0.0
    %707 = vadd.xlane.f32.xlu0 %v706
    %v708 = vpop.xlane.xlu0 %707
    %v709 = vrcp.pop %v705
    %v710 = vrcp.pop %v708
    %v711 = vmul.f32 %v700, %v709
    %v712 = vmul.f32 %v702, %v710
    %713 = vrot.lane.b32.xlu0 %v198, 56
    %v714 = vpop.permute.xlu0 %713
    %v717 = vsel %vm205, %v711, 0
    %719 = vmatprep.subr.mxu0 0.0
    %720 = vmatpush1.msra.mxu0 %v714
    %721 = vmatprep.subr.mxu0 0.0
    %722 = vmatpush1.msra.mxu0 0.0
    %723 = vmatprep.subr.mxu0 0.0
    %724 = vmatpush1.msra.mxu0 0.0
    %725 = vmatprep.subr.mxu0 0.0
    %726 = vmatpush1.msra.mxu0 0.0
    %727 = vmatprep.subr.mxu0 0.0
    %728 = vmatpush1.msra.mxu0 0.0
    %729 = vmatprep.subr.mxu0 0.0
    %730 = vmatpush1.msra.mxu0 0.0
    %731 = vmatprep.subr.mxu0 0.0
    %732 = vmatpush1.msra.mxu0 0.0
    %733 = vmatprep.subr.mxu0 0.0
    %734 = vmatpush1.msra.mxu0 0.0
    %735 = vmatprep.subr.mxu0 0.0
    %736 = vmatpush1.msra.mxu0 0.0
    %737 = vmatprep.subr.mxu0 0.0
    %738 = vmatpush1.msra.mxu0 0.0
    %739 = vmatprep.subr.mxu0 0.0
    %740 = vmatpush1.msra.mxu0 0.0
    %741 = vmatprep.subr.mxu0 0.0
    %742 = vmatpush1.msra.mxu0 0.0
    %743 = vmatprep.subr.mxu0 0.0
    %744 = vmatpush1.msra.mxu0 0.0
    %745 = vmatprep.subr.mxu0 0.0
    %746 = vmatpush1.msra.mxu0 0.0
    %747 = vmatprep.subr.mxu0 0.0
    %748 = vmatpush1.msra.mxu0 0.0
    %749 = vmatprep.subr.mxu0 0.0
    %750 = vmatpush1.msra.mxu0 0.0
    %751 = vmatprep.subr.mxu0 0.0
    %752 = vmatpush1.msra.mxu0 0.0
    %753 = vmatprep.subr.mxu0 0.0
    %754 = vmatpush1.msra.mxu0 0.0
    %755 = vmatprep.subr.mxu0 0.0
    %756 = vmatpush1.msra.mxu0 0.0
    %757 = vmatprep.subr.mxu0 0.0
    %758 = vmatpush1.msra.mxu0 0.0
    %759 = vmatprep.subr.mxu0 0.0
    %760 = vmatpush1.msra.mxu0 0.0
    %761 = vmatprep.subr.mxu0 0.0
    %762 = vmatpush1.msra.mxu0 0.0
    %763 = vmatprep.subr.mxu0 0.0
    %764 = vmatpush1.msra.mxu0 0.0
    %765 = vmatprep.subr.mxu0 0.0
    %766 = vmatpush1.msra.mxu0 0.0
    %767 = vmatprep.subr.mxu0 0.0
    %768 = vmatpush1.msra.mxu0 0.0
    %769 = vmatprep.subr.mxu0 0.0
    %770 = vmatpush1.msra.mxu0 0.0
    %771 = vmatprep.subr.mxu0 0.0
    %772 = vmatpush1.msra.mxu0 0.0
    %773 = vmatprep.subr.mxu0 0.0
    %774 = vmatpush1.msra.mxu0 0.0
    %775 = vmatprep.subr.mxu0 0.0
    %776 = vmatpush1.msra.mxu0 0.0
    %777 = vmatprep.subr.mxu0 0.0
    %778 = vmatpush1.msra.mxu0 0.0
    %779 = vmatprep.subr.mxu0 0.0
    %780 = vmatpush1.msra.mxu0 0.0
    %781 = vmatprep.subr.mxu0 0.0
    %782 = vmatpush1.msra.mxu0 0.0
    %783 = vmatprep.mubr.f32.mxu0 0.0
    %784 = vmatmul.mubr.f32.gmra.mrb[0].mxu0 %v717
    %v785 = vpop.f32.mrb[0].mxu0
    %v786 = vadd.f32 0.0, %v785
    %v787 = vpop.f32.mrb[0].mxu0
    %788 = vdwg.mxu0
    %789 = vrot.lane.b32.xlu0 %v199, 56
    %v790 = vpop.permute.xlu0 %789
    %v793 = vsel %vm205, %v712, 0
    %795 = vmatprep.subr.mxu0 0.0
    %796 = vmatpush1.msra.mxu0 %v790
    %797 = vmatprep.subr.mxu0 0.0
    %798 = vmatpush1.msra.mxu0 0.0
    %799 = vmatprep.subr.mxu0 0.0
    %800 = vmatpush1.msra.mxu0 0.0
    %801 = vmatprep.subr.mxu0 0.0
    %802 = vmatpush1.msra.mxu0 0.0
    %803 = vmatprep.subr.mxu0 0.0
    %804 = vmatpush1.msra.mxu0 0.0
    %805 = vmatprep.subr.mxu0 0.0
    %806 = vmatpush1.msra.mxu0 0.0
    %807 = vmatprep.subr.mxu0 0.0
    %808 = vmatpush1.msra.mxu0 0.0
    %809 = vmatprep.subr.mxu0 0.0
    %810 = vmatpush1.msra.mxu0 0.0
    %811 = vmatprep.subr.mxu0 0.0
    %812 = vmatpush1.msra.mxu0 0.0
    %813 = vmatprep.subr.mxu0 0.0
    %814 = vmatpush1.msra.mxu0 0.0
    %815 = vmatprep.subr.mxu0 0.0
    %816 = vmatpush1.msra.mxu0 0.0
    %817 = vmatprep.subr.mxu0 0.0
    %818 = vmatpush1.msra.mxu0 0.0
    %819 = vmatprep.subr.mxu0 0.0
    %820 = vmatpush1.msra.mxu0 0.0
    %821 = vmatprep.subr.mxu0 0.0
    %822 = vmatpush1.msra.mxu0 0.0
    %823 = vmatprep.subr.mxu0 0.0
    %824 = vmatpush1.msra.mxu0 0.0
    %825 = vmatprep.subr.mxu0 0.0
    %826 = vmatpush1.msra.mxu0 0.0
    %827 = vmatprep.subr.mxu0 0.0
    %828 = vmatpush1.msra.mxu0 0.0
    %829 = vmatprep.subr.mxu0 0.0
    %830 = vmatpush1.msra.mxu0 0.0
    %831 = vmatprep.subr.mxu0 0.0
    %832 = vmatpush1.msra.mxu0 0.0
    %833 = vmatprep.subr.mxu0 0.0
    %834 = vmatpush1.msra.mxu0 0.0
    %835 = vmatprep.subr.mxu0 0.0
    %836 = vmatpush1.msra.mxu0 0.0
    %837 = vmatprep.subr.mxu0 0.0
    %838 = vmatpush1.msra.mxu0 0.0
    %839 = vmatprep.subr.mxu0 0.0
    %840 = vmatpush1.msra.mxu0 0.0
    %841 = vmatprep.subr.mxu0 0.0
    %842 = vmatpush1.msra.mxu0 0.0
    %843 = vmatprep.subr.mxu0 0.0
    %844 = vmatpush1.msra.mxu0 0.0
    %845 = vmatprep.subr.mxu0 0.0
    %846 = vmatpush1.msra.mxu0 0.0
    %847 = vmatprep.subr.mxu0 0.0
    %848 = vmatpush1.msra.mxu0 0.0
    %849 = vmatprep.subr.mxu0 0.0
    %850 = vmatpush1.msra.mxu0 0.0
    %851 = vmatprep.subr.mxu0 0.0
    %852 = vmatpush1.msra.mxu0 0.0
    %853 = vmatprep.subr.mxu0 0.0
    %854 = vmatpush1.msra.mxu0 0.0
    %855 = vmatprep.subr.mxu0 0.0
    %856 = vmatpush1.msra.mxu0 0.0
    %857 = vmatprep.subr.mxu0 0.0
    %858 = vmatpush1.msra.mxu0 0.0
    %859 = vmatprep.mubr.f32.mxu0 0.0
    %860 = vmatmul.mubr.f32.gmra.mrb[0].mxu0 %v793
    %v861 = vpop.f32.mrb[0].mxu0
    %v862 = vadd.f32 0.0, %v861
    %v863 = vpop.f32.mrb[0].mxu0
    %864 = vdwg.mxu0
    %865 = vrot.lane.b32.xlu0 %v178, 112
    %v866 = vpop.permute.xlu0 %865
    %867 = vrot.lane.b32.xlu0 %v188, 80
    %v868 = vpop.permute.xlu0 %867
    %v869 = vsel %vm205, %v866, 0
    %v871 = vsel %vm205, %v868, 0
    %873 = vmatprep.subr.mxu0 0.0
    %874 = vmatpush1.xpose.msra.mxu0 %v871
    %875 = vmatprep.subr.mxu0 0.0
    %876 = vmatpush1.xpose.msra.mxu0 0.0
    %877 = vmatprep.subr.mxu0 0.0
    %878 = vmatpush1.xpose.msra.mxu0 0.0
    %879 = vmatprep.subr.mxu0 0.0
    %880 = vmatpush1.xpose.msra.mxu0 0.0
    %881 = vmatprep.subr.mxu0 0.0
    %882 = vmatpush1.xpose.msra.mxu0 0.0
    %883 = vmatprep.subr.mxu0 0.0
    %884 = vmatpush1.xpose.msra.mxu0 0.0
    %885 = vmatprep.subr.mxu0 0.0
    %886 = vmatpush1.xpose.msra.mxu0 0.0
    %887 = vmatprep.subr.mxu0 0.0
    %888 = vmatpush1.xpose.msra.mxu0 0.0
    %889 = vmatprep.subr.mxu0 0.0
    %890 = vmatpush1.xpose.msra.mxu0 0.0
    %891 = vmatprep.subr.mxu0 0.0
    %892 = vmatpush1.xpose.msra.mxu0 0.0
    %893 = vmatprep.subr.mxu0 0.0
    %894 = vmatpush1.xpose.msra.mxu0 0.0
    %895 = vmatprep.subr.mxu0 0.0
    %896 = vmatpush1.xpose.msra.mxu0 0.0
    %897 = vmatprep.subr.mxu0 0.0
    %898 = vmatpush1.xpose.msra.mxu0 0.0
    %899 = vmatprep.subr.mxu0 0.0
    %900 = vmatpush1.xpose.msra.mxu0 0.0
    %901 = vmatprep.subr.mxu0 0.0
    %902 = vmatpush1.xpose.msra.mxu0 0.0
    %903 = vmatprep.subr.mxu0 0.0
    %904 = vmatpush1.xpose.msra.mxu0 0.0
    %905 = vmatprep.subr.mxu0 0.0
    %906 = vmatpush1.xpose.msra.mxu0 0.0
    %907 = vmatprep.subr.mxu0 0.0
    %908 = vmatpush1.xpose.msra.mxu0 0.0
    %909 = vmatprep.subr.mxu0 0.0
    %910 = vmatpush1.xpose.msra.mxu0 0.0
    %911 = vmatprep.subr.mxu0 0.0
    %912 = vmatpush1.xpose.msra.mxu0 0.0
    %913 = vmatprep.subr.mxu0 0.0
    %914 = vmatpush1.xpose.msra.mxu0 0.0
    %915 = vmatprep.subr.mxu0 0.0
    %916 = vmatpush1.xpose.msra.mxu0 0.0
    %917 = vmatprep.subr.mxu0 0.0
    %918 = vmatpush1.xpose.msra.mxu0 0.0
    %919 = vmatprep.subr.mxu0 0.0
    %920 = vmatpush1.xpose.msra.mxu0 0.0
    %921 = vmatprep.subr.mxu0 0.0
    %922 = vmatpush1.xpose.msra.mxu0 0.0
    %923 = vmatprep.subr.mxu0 0.0
    %924 = vmatpush1.xpose.msra.mxu0 0.0
    %925 = vmatprep.subr.mxu0 0.0
    %926 = vmatpush1.xpose.msra.mxu0 0.0
    %927 = vmatprep.subr.mxu0 0.0
    %928 = vmatpush1.xpose.msra.mxu0 0.0
    %929 = vmatprep.subr.mxu0 0.0
    %930 = vmatpush1.xpose.msra.mxu0 0.0
    %931 = vmatprep.subr.mxu0 0.0
    %932 = vmatpush1.xpose.msra.mxu0 0.0
    %933 = vmatprep.subr.mxu0 0.0
    %934 = vmatpush1.xpose.msra.mxu0 0.0
    %935 = vmatprep.subr.mxu0 0.0
    %936 = vmatpush1.xpose.msra.mxu0 0.0
    %937 = vmatprep.mubr.f32.mxu0 0.0
    %938 = vmatmul.mubr.f32.gmra.mrb[0].mxu0 %v869
    %v939 = vpop.f32.mrb[0].mxu0
    %v940 = vadd.f32 %v200, %v939
    %v941 = vpop.f32.mrb[0].mxu0
    %942 = vdwg.mxu0
    %943 = vrot.lane.b32.xlu0 %v179, 112
    %v944 = vpop.permute.xlu0 %943
    %945 = vrot.lane.b32.xlu0 %v189, 80
    %v946 = vpop.permute.xlu0 %945
    %v947 = vsel %vm205, %v944, 0
    %v949 = vsel %vm205, %v946, 0
    %951 = vmatprep.subr.mxu0 0.0
    %952 = vmatpush1.xpose.msra.mxu0 %v949
    %953 = vmatprep.subr.mxu0 0.0
    %954 = vmatpush1.xpose.msra.mxu0 0.0
    %955 = vmatprep.subr.mxu0 0.0
    %956 = vmatpush1.xpose.msra.mxu0 0.0
    %957 = vmatprep.subr.mxu0 0.0
    %958 = vmatpush1.xpose.msra.mxu0 0.0
    %959 = vmatprep.subr.mxu0 0.0
    %960 = vmatpush1.xpose.msra.mxu0 0.0
    %961 = vmatprep.subr.mxu0 0.0
    %962 = vmatpush1.xpose.msra.mxu0 0.0
    %963 = vmatprep.subr.mxu0 0.0
    %964 = vmatpush1.xpose.msra.mxu0 0.0
    %965 = vmatprep.subr.mxu0 0.0
    %966 = vmatpush1.xpose.msra.mxu0 0.0
    %967 = vmatprep.subr.mxu0 0.0
    %968 = vmatpush1.xpose.msra.mxu0 0.0
    %969 = vmatprep.subr.mxu0 0.0
    %970 = vmatpush1.xpose.msra.mxu0 0.0
    %971 = vmatprep.subr.mxu0 0.0
    %972 = vmatpush1.xpose.msra.mxu0 0.0
    %973 = vmatprep.subr.mxu0 0.0
    %974 = vmatpush1.xpose.msra.mxu0 0.0
    %975 = vmatprep.subr.mxu0 0.0
    %976 = vmatpush1.xpose.msra.mxu0 0.0
    %977 = vmatprep.subr.mxu0 0.0
    %978 = vmatpush1.xpose.msra.mxu0 0.0
    %979 = vmatprep.subr.mxu0 0.0
    %980 = vmatpush1.xpose.msra.mxu0 0.0
    %981 = vmatprep.subr.mxu0 0.0
    %982 = vmatpush1.xpose.msra.mxu0 0.0
    %983 = vmatprep.subr.mxu0 0.0
    %984 = vmatpush1.xpose.msra.mxu0 0.0
    %985 = vmatprep.subr.mxu0 0.0
    %986 = vmatpush1.xpose.msra.mxu0 0.0
    %987 = vmatprep.subr.mxu0 0.0
    %988 = vmatpush1.xpose.msra.mxu0 0.0
    %989 = vmatprep.subr.mxu0 0.0
    %990 = vmatpush1.xpose.msra.mxu0 0.0
    %991 = vmatprep.subr.mxu0 0.0
    %992 = vmatpush1.xpose.msra.mxu0 0.0
    %993 = vmatprep.subr.mxu0 0.0
    %994 = vmatpush1.xpose.msra.mxu0 0.0
    %995 = vmatprep.subr.mxu0 0.0
    %996 = vmatpush1.xpose.msra.mxu0 0.0
    %997 = vmatprep.subr.mxu0 0.0
    %998 = vmatpush1.xpose.msra.mxu0 0.0
    %999 = vmatprep.subr.mxu0 0.0
    %1000 = vmatpush1.xpose.msra.mxu0 0.0
    %1001 = vmatprep.subr.mxu0 0.0
    %1002 = vmatpush1.xpose.msra.mxu0 0.0
    %1003 = vmatprep.subr.mxu0 0.0
    %1004 = vmatpush1.xpose.msra.mxu0 0.0
    %1005 = vmatprep.subr.mxu0 0.0
    %1006 = vmatpush1.xpose.msra.mxu0 0.0
    %1007 = vmatprep.subr.mxu0 0.0
    %1008 = vmatpush1.xpose.msra.mxu0 0.0
    %1009 = vmatprep.subr.mxu0 0.0
    %1010 = vmatpush1.xpose.msra.mxu0 0.0
    %1011 = vmatprep.subr.mxu0 0.0
    %1012 = vmatpush1.xpose.msra.mxu0 0.0
    %1013 = vmatprep.subr.mxu0 0.0
    %1014 = vmatpush1.xpose.msra.mxu0 0.0
    %1015 = vmatprep.mubr.f32.mxu0 0.0
    %1016 = vmatmul.mubr.f32.gmra.mrb[0].mxu0 %v947
    %v1017 = vpop.f32.mrb[0].mxu0
    %v1018 = vadd.f32 %v201, %v1017
    %v1019 = vpop.f32.mrb[0].mxu0
    %1020 = vdwg.mxu0
    %v1021 = vsel %vm205, %v940, -inf
    %1022 = vmax.xlane.f32.xlu0 %v1021
    %v1023 = vpop.xlane.xlu0 %1022
    %v1024 = vsel %vm205, %v1018, -inf
    %1025 = vmax.xlane.f32.xlu0 %v1024
    %v1026 = vpop.xlane.xlu0 %1025
    %v1027 = vsub.f32 %v940, %v1023
    %v1028 = vsub.f32 %v1018, %v1026
    %v1029 = vmul.f32 %v1027, 1.442695
    %v1030 = vpow.pop %v1029
    %v1031 = vmul.f32 %v1028, 1.442695
    %v1032 = vpow.pop %v1031
    %v1033 = vsel %vm205, %v1030, 0.0
    %1034 = vadd.xlane.f32.xlu0 %v1033
    %v1035 = vpop.xlane.xlu0 %1034
    %v1036 = vsel %vm205, %v1032, 0.0
    %1037 = vadd.xlane.f32.xlu0 %v1036
    %v1038 = vpop.xlane.xlu0 %1037
    %v1039 = vrcp.pop %v1035
    %v1040 = vrcp.pop %v1038
    %v1041 = vmul.f32 %v1030, %v1039
    %v1042 = vmul.f32 %v1032, %v1040
    %1043 = vrot.lane.b32.xlu0 %v198, 48
    %v1044 = vpop.permute.xlu0 %1043
    %v1047 = vsel %vm205, %v1041, 0
    %1049 = vmatprep.subr.mxu0 0.0
    %1050 = vmatpush1.msra.mxu0 %v1044
    %1051 = vmatprep.subr.mxu0 0.0
    %1052 = vmatpush1.msra.mxu0 0.0
    %1053 = vmatprep.subr.mxu0 0.0
    %1054 = vmatpush1.msra.mxu0 0.0
    %1055 = vmatprep.subr.mxu0 0.0
    %1056 = vmatpush1.msra.mxu0 0.0
    %1057 = vmatprep.subr.mxu0 0.0
    %1058 = vmatpush1.msra.mxu0 0.0
    %1059 = vmatprep.subr.mxu0 0.0
    %1060 = vmatpush1.msra.mxu0 0.0
    %1061 = vmatprep.subr.mxu0 0.0
    %1062 = vmatpush1.msra.mxu0 0.0
    %1063 = vmatprep.subr.mxu0 0.0
    %1064 = vmatpush1.msra.mxu0 0.0
    %1065 = vmatprep.subr.mxu0 0.0
    %1066 = vmatpush1.msra.mxu0 0.0
    %1067 = vmatprep.subr.mxu0 0.0
    %1068 = vmatpush1.msra.mxu0 0.0
    %1069 = vmatprep.subr.mxu0 0.0
    %1070 = vmatpush1.msra.mxu0 0.0
    %1071 = vmatprep.subr.mxu0 0.0
    %1072 = vmatpush1.msra.mxu0 0.0
    %1073 = vmatprep.subr.mxu0 0.0
    %1074 = vmatpush1.msra.mxu0 0.0
    %1075 = vmatprep.subr.mxu0 0.0
    %1076 = vmatpush1.msra.mxu0 0.0
    %1077 = vmatprep.subr.mxu0 0.0
    %1078 = vmatpush1.msra.mxu0 0.0
    %1079 = vmatprep.subr.mxu0 0.0
    %1080 = vmatpush1.msra.mxu0 0.0
    %1081 = vmatprep.subr.mxu0 0.0
    %1082 = vmatpush1.msra.mxu0 0.0
    %1083 = vmatprep.subr.mxu0 0.0
    %1084 = vmatpush1.msra.mxu0 0.0
    %1085 = vmatprep.subr.mxu0 0.0
    %1086 = vmatpush1.msra.mxu0 0.0
    %1087 = vmatprep.subr.mxu0 0.0
    %1088 = vmatpush1.msra.mxu0 0.0
    %1089 = vmatprep.subr.mxu0 0.0
    %1090 = vmatpush1.msra.mxu0 0.0
    %1091 = vmatprep.subr.mxu0 0.0
    %1092 = vmatpush1.msra.mxu0 0.0
    %1093 = vmatprep.subr.mxu0 0.0
    %1094 = vmatpush1.msra.mxu0 0.0
    %1095 = vmatprep.subr.mxu0 0.0
    %1096 = vmatpush1.msra.mxu0 0.0
    %1097 = vmatprep.subr.mxu0 0.0
    %1098 = vmatpush1.msra.mxu0 0.0
    %1099 = vmatprep.subr.mxu0 0.0
    %1100 = vmatpush1.msra.mxu0 0.0
    %1101 = vmatprep.subr.mxu0 0.0
    %1102 = vmatpush1.msra.mxu0 0.0
    %1103 = vmatprep.subr.mxu0 0.0
    %1104 = vmatpush1.msra.mxu0 0.0
    %1105 = vmatprep.subr.mxu0 0.0
    %1106 = vmatpush1.msra.mxu0 0.0
    %1107 = vmatprep.subr.mxu0 0.0
    %1108 = vmatpush1.msra.mxu0 0.0
    %1109 = vmatprep.subr.mxu0 0.0
    %1110 = vmatpush1.msra.mxu0 0.0
    %1111 = vmatprep.subr.mxu0 0.0
    %1112 = vmatpush1.msra.mxu0 0.0
    %1113 = vmatprep.mubr.f32.mxu0 0.0
    %1114 = vmatmul.mubr.f32.gmra.mrb[0].mxu0 %v1047
    %v1115 = vpop.f32.mrb[0].mxu0
    %v1116 = vadd.f32 0.0, %v1115
    %v1117 = vpop.f32.mrb[0].mxu0
    %1118 = vdwg.mxu0
    %1119 = vrot.lane.b32.xlu0 %v199, 48
    %v1120 = vpop.permute.xlu0 %1119
    %v1123 = vsel %vm205, %v1042, 0
    %1125 = vmatprep.subr.mxu0 0.0
    %1126 = vmatpush1.msra.mxu0 %v1120
    %1127 = vmatprep.subr.mxu0 0.0
    %1128 = vmatpush1.msra.mxu0 0.0
    %1129 = vmatprep.subr.mxu0 0.0
    %1130 = vmatpush1.msra.mxu0 0.0
    %1131 = vmatprep.subr.mxu0 0.0
    %1132 = vmatpush1.msra.mxu0 0.0
    %1133 = vmatprep.subr.mxu0 0.0
    %1134 = vmatpush1.msra.mxu0 0.0
    %1135 = vmatprep.subr.mxu0 0.0
    %1136 = vmatpush1.msra.mxu0 0.0
    %1137 = vmatprep.subr.mxu0 0.0
    %1138 = vmatpush1.msra.mxu0 0.0
    %1139 = vmatprep.subr.mxu0 0.0
    %1140 = vmatpush1.msra.mxu0 0.0
    %1141 = vmatprep.subr.mxu0 0.0
    %1142 = vmatpush1.msra.mxu0 0.0
    %1143 = vmatprep.subr.mxu0 0.0
    %1144 = vmatpush1.msra.mxu0 0.0
    %1145 = vmatprep.subr.mxu0 0.0
    %1146 = vmatpush1.msra.mxu0 0.0
    %1147 = vmatprep.subr.mxu0 0.0
    %1148 = vmatpush1.msra.mxu0 0.0
    %1149 = vmatprep.subr.mxu0 0.0
    %1150 = vmatpush1.msra.mxu0 0.0
    %1151 = vmatprep.subr.mxu0 0.0
    %1152 = vmatpush1.msra.mxu0 0.0
    %1153 = vmatprep.subr.mxu0 0.0
    %1154 = vmatpush1.msra.mxu0 0.0
    %1155 = vmatprep.subr.mxu0 0.0
    %1156 = vmatpush1.msra.mxu0 0.0
    %1157 = vmatprep.subr.mxu0 0.0
    %1158 = vmatpush1.msra.mxu0 0.0
    %1159 = vmatprep.subr.mxu0 0.0
    %1160 = vmatpush1.msra.mxu0 0.0
    %1161 = vmatprep.subr.mxu0 0.0
    %1162 = vmatpush1.msra.mxu0 0.0
    %1163 = vmatprep.subr.mxu0 0.0
    %1164 = vmatpush1.msra.mxu0 0.0
    %1165 = vmatprep.subr.mxu0 0.0
    %1166 = vmatpush1.msra.mxu0 0.0
    %1167 = vmatprep.subr.mxu0 0.0
    %1168 = vmatpush1.msra.mxu0 0.0
    %1169 = vmatprep.subr.mxu0 0.0
    %1170 = vmatpush1.msra.mxu0 0.0
    %1171 = vmatprep.subr.mxu0 0.0
    %1172 = vmatpush1.msra.mxu0 0.0
    %1173 = vmatprep.subr.mxu0 0.0
    %1174 = vmatpush1.msra.mxu0 0.0
    %1175 = vmatprep.subr.mxu0 0.0
    %1176 = vmatpush1.msra.mxu0 0.0
    %1177 = vmatprep.subr.mxu0 0.0
    %1178 = vmatpush1.msra.mxu0 0.0
    %1179 = vmatprep.subr.mxu0 0.0
    %1180 = vmatpush1.msra.mxu0 0.0
    %1181 = vmatprep.subr.mxu0 0.0
    %1182 = vmatpush1.msra.mxu0 0.0
    %1183 = vmatprep.subr.mxu0 0.0
    %1184 = vmatpush1.msra.mxu0 0.0
    %1185 = vmatprep.subr.mxu0 0.0
    %1186 = vmatpush1.msra.mxu0 0.0
    %1187 = vmatprep.subr.mxu0 0.0
    %1188 = vmatpush1.msra.mxu0 0.0
    %1189 = vmatprep.mubr.f32.mxu0 0.0
    %1190 = vmatmul.mubr.f32.gmra.mrb[0].mxu0 %v1123
    %v1191 = vpop.f32.mrb[0].mxu0
    %v1192 = vadd.f32 0.0, %v1191
    %v1193 = vpop.f32.mrb[0].mxu0
    %1194 = vdwg.mxu0
    %1195 = vrot.lane.b32.xlu0 %v178, 104
    %v1196 = vpop.permute.xlu0 %1195
    %1197 = vrot.lane.b32.xlu0 %v188, 72
    %v1198 = vpop.permute.xlu0 %1197
    %v1199 = vsel %vm205, %v1196, 0
    %v1201 = vsel %vm205, %v1198, 0
    %1203 = vmatprep.subr.mxu0 0.0
    %1204 = vmatpush1.xpose.msra.mxu0 %v1201
    %1205 = vmatprep.subr.mxu0 0.0
    %1206 = vmatpush1.xpose.msra.mxu0 0.0
    %1207 = vmatprep.subr.mxu0 0.0
    %1208 = vmatpush1.xpose.msra.mxu0 0.0
    %1209 = vmatprep.subr.mxu0 0.0
    %1210 = vmatpush1.xpose.msra.mxu0 0.0
    %1211 = vmatprep.subr.mxu0 0.0
    %1212 = vmatpush1.xpose.msra.mxu0 0.0
    %1213 = vmatprep.subr.mxu0 0.0
    %1214 = vmatpush1.xpose.msra.mxu0 0.0
    %1215 = vmatprep.subr.mxu0 0.0
    %1216 = vmatpush1.xpose.msra.mxu0 0.0
    %1217 = vmatprep.subr.mxu0 0.0
    %1218 = vmatpush1.xpose.msra.mxu0 0.0
    %1219 = vmatprep.subr.mxu0 0.0
    %1220 = vmatpush1.xpose.msra.mxu0 0.0
    %1221 = vmatprep.subr.mxu0 0.0
    %1222 = vmatpush1.xpose.msra.mxu0 0.0
    %1223 = vmatprep.subr.mxu0 0.0
    %1224 = vmatpush1.xpose.msra.mxu0 0.0
    %1225 = vmatprep.subr.mxu0 0.0
    %1226 = vmatpush1.xpose.msra.mxu0 0.0
    %1227 = vmatprep.subr.mxu0 0.0
    %1228 = vmatpush1.xpose.msra.mxu0 0.0
    %1229 = vmatprep.subr.mxu0 0.0
    %1230 = vmatpush1.xpose.msra.mxu0 0.0
    %1231 = vmatprep.subr.mxu0 0.0
    %1232 = vmatpush1.xpose.msra.mxu0 0.0
    %1233 = vmatprep.subr.mxu0 0.0
    %1234 = vmatpush1.xpose.msra.mxu0 0.0
    %1235 = vmatprep.subr.mxu0 0.0
    %1236 = vmatpush1.xpose.msra.mxu0 0.0
    %1237 = vmatprep.subr.mxu0 0.0
    %1238 = vmatpush1.xpose.msra.mxu0 0.0
    %1239 = vmatprep.subr.mxu0 0.0
    %1240 = vmatpush1.xpose.msra.mxu0 0.0
    %1241 = vmatprep.subr.mxu0 0.0
    %1242 = vmatpush1.xpose.msra.mxu0 0.0
    %1243 = vmatprep.subr.mxu0 0.0
    %1244 = vmatpush1.xpose.msra.mxu0 0.0
    %1245 = vmatprep.subr.mxu0 0.0
    %1246 = vmatpush1.xpose.msra.mxu0 0.0
    %1247 = vmatprep.subr.mxu0 0.0
    %1248 = vmatpush1.xpose.msra.mxu0 0.0
    %1249 = vmatprep.subr.mxu0 0.0
    %1250 = vmatpush1.xpose.msra.mxu0 0.0
    %1251 = vmatprep.subr.mxu0 0.0
    %1252 = vmatpush1.xpose.msra.mxu0 0.0
    %1253 = vmatprep.subr.mxu0 0.0
    %1254 = vmatpush1.xpose.msra.mxu0 0.0
    %1255 = vmatprep.subr.mxu0 0.0
    %1256 = vmatpush1.xpose.msra.mxu0 0.0
    %1257 = vmatprep.subr.mxu0 0.0
    %1258 = vmatpush1.xpose.msra.mxu0 0.0
    %1259 = vmatprep.subr.mxu0 0.0
    %1260 = vmatpush1.xpose.msra.mxu0 0.0
    %1261 = vmatprep.subr.mxu0 0.0
    %1262 = vmatpush1.xpose.msra.mxu0 0.0
    %1263 = vmatprep.subr.mxu0 0.0
    %1264 = vmatpush1.xpose.msra.mxu0 0.0
    %1265 = vmatprep.subr.mxu0 0.0
    %1266 = vmatpush1.xpose.msra.mxu0 0.0
    %1267 = vmatprep.mubr.f32.mxu0 0.0
    %1268 = vmatmul.mubr.f32.gmra.mrb[0].mxu0 %v1199
    %v1269 = vpop.f32.mrb[0].mxu0
    %v1270 = vadd.f32 %v200, %v1269
    %v1271 = vpop.f32.mrb[0].mxu0
    %1272 = vdwg.mxu0
    %1273 = vrot.lane.b32.xlu0 %v179, 104
    %v1274 = vpop.permute.xlu0 %1273
    %1275 = vrot.lane.b32.xlu0 %v189, 72
    %v1276 = vpop.permute.xlu0 %1275
    %v1277 = vsel %vm205, %v1274, 0
    %v1279 = vsel %vm205, %v1276, 0
    %1281 = vmatprep.subr.mxu0 0.0
    %1282 = vmatpush1.xpose.msra.mxu0 %v1279
    %1283 = vmatprep.subr.mxu0 0.0
    %1284 = vmatpush1.xpose.msra.mxu0 0.0
    %1285 = vmatprep.subr.mxu0 0.0
    %1286 = vmatpush1.xpose.msra.mxu0 0.0
    %1287 = vmatprep.subr.mxu0 0.0
    %1288 = vmatpush1.xpose.msra.mxu0 0.0
    %1289 = vmatprep.subr.mxu0 0.0
    %1290 = vmatpush1.xpose.msra.mxu0 0.0
    %1291 = vmatprep.subr.mxu0 0.0
    %1292 = vmatpush1.xpose.msra.mxu0 0.0
    %1293 = vmatprep.subr.mxu0 0.0
    %1294 = vmatpush1.xpose.msra.mxu0 0.0
    %1295 = vmatprep.subr.mxu0 0.0
    %1296 = vmatpush1.xpose.msra.mxu0 0.0
    %1297 = vmatprep.subr.mxu0 0.0
    %1298 = vmatpush1.xpose.msra.mxu0 0.0
    %1299 = vmatprep.subr.mxu0 0.0
    %1300 = vmatpush1.xpose.msra.mxu0 0.0
    %1301 = vmatprep.subr.mxu0 0.0
    %1302 = vmatpush1.xpose.msra.mxu0 0.0
    %1303 = vmatprep.subr.mxu0 0.0
    %1304 = vmatpush1.xpose.msra.mxu0 0.0
    %1305 = vmatprep.subr.mxu0 0.0
    %1306 = vmatpush1.xpose.msra.mxu0 0.0
    %1307 = vmatprep.subr.mxu0 0.0
    %1308 = vmatpush1.xpose.msra.mxu0 0.0
    %1309 = vmatprep.subr.mxu0 0.0
    %1310 = vmatpush1.xpose.msra.mxu0 0.0
    %1311 = vmatprep.subr.mxu0 0.0
    %1312 = vmatpush1.xpose.msra.mxu0 0.0
    %1313 = vmatprep.subr.mxu0 0.0
    %1314 = vmatpush1.xpose.msra.mxu0 0.0
    %1315 = vmatprep.subr.mxu0 0.0
    %1316 = vmatpush1.xpose.msra.mxu0 0.0
    %1317 = vmatprep.subr.mxu0 0.0
    %1318 = vmatpush1.xpose.msra.mxu0 0.0
    %1319 = vmatprep.subr.mxu0 0.0
    %1320 = vmatpush1.xpose.msra.mxu0 0.0
    %1321 = vmatprep.subr.mxu0 0.0
    %1322 = vmatpush1.xpose.msra.mxu0 0.0
    %1323 = vmatprep.subr.mxu0 0.0
    %1324 = vmatpush1.xpose.msra.mxu0 0.0
    %1325 = vmatprep.subr.mxu0 0.0
    %1326 = vmatpush1.xpose.msra.mxu0 0.0
    %1327 = vmatprep.subr.mxu0 0.0
    %1328 = vmatpush1.xpose.msra.mxu0 0.0
    %1329 = vmatprep.subr.mxu0 0.0
    %1330 = vmatpush1.xpose.msra.mxu0 0.0
    %1331 = vmatprep.subr.mxu0 0.0
    %1332 = vmatpush1.xpose.msra.mxu0 0.0
    %1333 = vmatprep.subr.mxu0 0.0
    %1334 = vmatpush1.xpose.msra.mxu0 0.0
    %1335 = vmatprep.subr.mxu0 0.0
    %1336 = vmatpush1.xpose.msra.mxu0 0.0
    %1337 = vmatprep.subr.mxu0 0.0
    %1338 = vmatpush1.xpose.msra.mxu0 0.0
    %1339 = vmatprep.subr.mxu0 0.0
    %1340 = vmatpush1.xpose.msra.mxu0 0.0
    %1341 = vmatprep.subr.mxu0 0.0
    %1342 = vmatpush1.xpose.msra.mxu0 0.0
    %1343 = vmatprep.subr.mxu0 0.0
    %1344 = vmatpush1.xpose.msra.mxu0 0.0
    %1345 = vmatprep.mubr.f32.mxu0 0.0
    %1346 = vmatmul.mubr.f32.gmra.mrb[0].mxu0 %v1277
    %v1347 = vpop.f32.mrb[0].mxu0
    %v1348 = vadd.f32 %v201, %v1347
    %v1349 = vpop.f32.mrb[0].mxu0
    %1350 = vdwg.mxu0
    %v1351 = vsel %vm205, %v1270, -inf
    %1352 = vmax.xlane.f32.xlu0 %v1351
    %v1353 = vpop.xlane.xlu0 %1352
    %v1354 = vsel %vm205, %v1348, -inf
    %1355 = vmax.xlane.f32.xlu0 %v1354
    %v1356 = vpop.xlane.xlu0 %1355
    %v1357 = vsub.f32 %v1270, %v1353
    %v1358 = vsub.f32 %v1348, %v1356
    %v1359 = vmul.f32 %v1357, 1.442695
    %v1360 = vpow.pop %v1359
    %v1361 = vmul.f32 %v1358, 1.442695
    %v1362 = vpow.pop %v1361
    %v1363 = vsel %vm205, %v1360, 0.0
    %1364 = vadd.xlane.f32.xlu0 %v1363
    %v1365 = vpop.xlane.xlu0 %1364
    %v1366 = vsel %vm205, %v1362, 0.0
    %1367 = vadd.xlane.f32.xlu0 %v1366
    %v1368 = vpop.xlane.xlu0 %1367
    %v1369 = vrcp.pop %v1365
    %v1370 = vrcp.pop %v1368
    %v1371 = vmul.f32 %v1360, %v1369
    %v1372 = vmul.f32 %v1362, %v1370
    %1373 = vrot.lane.b32.xlu0 %v198, 40
    %v1374 = vpop.permute.xlu0 %1373
    %v1377 = vsel %vm205, %v1371, 0
    %1379 = vmatprep.subr.mxu0 0.0
    %1380 = vmatpush1.msra.mxu0 %v1374
    %1381 = vmatprep.subr.mxu0 0.0
    %1382 = vmatpush1.msra.mxu0 0.0
    %1383 = vmatprep.subr.mxu0 0.0
    %1384 = vmatpush1.msra.mxu0 0.0
    %1385 = vmatprep.subr.mxu0 0.0
    %1386 = vmatpush1.msra.mxu0 0.0
    %1387 = vmatprep.subr.mxu0 0.0
    %1388 = vmatpush1.msra.mxu0 0.0
    %1389 = vmatprep.subr.mxu0 0.0
    %1390 = vmatpush1.msra.mxu0 0.0
    %1391 = vmatprep.subr.mxu0 0.0
    %1392 = vmatpush1.msra.mxu0 0.0
    %1393 = vmatprep.subr.mxu0 0.0
    %1394 = vmatpush1.msra.mxu0 0.0
    %1395 = vmatprep.subr.mxu0 0.0
    %1396 = vmatpush1.msra.mxu0 0.0
    %1397 = vmatprep.subr.mxu0 0.0
    %1398 = vmatpush1.msra.mxu0 0.0
    %1399 = vmatprep.subr.mxu0 0.0
    %1400 = vmatpush1.msra.mxu0 0.0
    %1401 = vmatprep.subr.mxu0 0.0
    %1402 = vmatpush1.msra.mxu0 0.0
    %1403 = vmatprep.subr.mxu0 0.0
    %1404 = vmatpush1.msra.mxu0 0.0
    %1405 = vmatprep.subr.mxu0 0.0
    %1406 = vmatpush1.msra.mxu0 0.0
    %1407 = vmatprep.subr.mxu0 0.0
    %1408 = vmatpush1.msra.mxu0 0.0
    %1409 = vmatprep.subr.mxu0 0.0
    %1410 = vmatpush1.msra.mxu0 0.0
    %1411 = vmatprep.subr.mxu0 0.0
    %1412 = vmatpush1.msra.mxu0 0.0
    %1413 = vmatprep.subr.mxu0 0.0
    %1414 = vmatpush1.msra.mxu0 0.0
    %1415 = vmatprep.subr.mxu0 0.0
    %1416 = vmatpush1.msra.mxu0 0.0
    %1417 = vmatprep.subr.mxu0 0.0
    %1418 = vmatpush1.msra.mxu0 0.0
    %1419 = vmatprep.subr.mxu0 0.0
    %1420 = vmatpush1.msra.mxu0 0.0
    %1421 = vmatprep.subr.mxu0 0.0
    %1422 = vmatpush1.msra.mxu0 0.0
    %1423 = vmatprep.subr.mxu0 0.0
    %1424 = vmatpush1.msra.mxu0 0.0
    %1425 = vmatprep.subr.mxu0 0.0
    %1426 = vmatpush1.msra.mxu0 0.0
    %1427 = vmatprep.subr.mxu0 0.0
    %1428 = vmatpush1.msra.mxu0 0.0
    %1429 = vmatprep.subr.mxu0 0.0
    %1430 = vmatpush1.msra.mxu0 0.0
    %1431 = vmatprep.subr.mxu0 0.0
    %1432 = vmatpush1.msra.mxu0 0.0
    %1433 = vmatprep.subr.mxu0 0.0
    %1434 = vmatpush1.msra.mxu0 0.0
    %1435 = vmatprep.subr.mxu0 0.0
    %1436 = vmatpush1.msra.mxu0 0.0
    %1437 = vmatprep.subr.mxu0 0.0
    %1438 = vmatpush1.msra.mxu0 0.0
    %1439 = vmatprep.subr.mxu0 0.0
    %1440 = vmatpush1.msra.mxu0 0.0
    %1441 = vmatprep.subr.mxu0 0.0
    %1442 = vmatpush1.msra.mxu0 0.0
    %1443 = vmatprep.mubr.f32.mxu0 0.0
    %1444 = vmatmul.mubr.f32.gmra.mrb[0].mxu0 %v1377
    %v1445 = vpop.f32.mrb[0].mxu0
    %v1446 = vadd.f32 0.0, %v1445
    %v1447 = vpop.f32.mrb[0].mxu0
    %1448 = vdwg.mxu0
    %1449 = vrot.lane.b32.xlu0 %v199, 40
    %v1450 = vpop.permute.xlu0 %1449
    %v1453 = vsel %vm205, %v1372, 0
    %1455 = vmatprep.subr.mxu0 0.0
    %1456 = vmatpush1.msra.mxu0 %v1450
    %1457 = vmatprep.subr.mxu0 0.0
    %1458 = vmatpush1.msra.mxu0 0.0
    %1459 = vmatprep.subr.mxu0 0.0
    %1460 = vmatpush1.msra.mxu0 0.0
    %1461 = vmatprep.subr.mxu0 0.0
    %1462 = vmatpush1.msra.mxu0 0.0
    %1463 = vmatprep.subr.mxu0 0.0
    %1464 = vmatpush1.msra.mxu0 0.0
    %1465 = vmatprep.subr.mxu0 0.0
    %1466 = vmatpush1.msra.mxu0 0.0
    %1467 = vmatprep.subr.mxu0 0.0
    %1468 = vmatpush1.msra.mxu0 0.0
    %1469 = vmatprep.subr.mxu0 0.0
    %1470 = vmatpush1.msra.mxu0 0.0
    %1471 = vmatprep.subr.mxu0 0.0
    %1472 = vmatpush1.msra.mxu0 0.0
    %1473 = vmatprep.subr.mxu0 0.0
    %1474 = vmatpush1.msra.mxu0 0.0
    %1475 = vmatprep.subr.mxu0 0.0
    %1476 = vmatpush1.msra.mxu0 0.0
    %1477 = vmatprep.subr.mxu0 0.0
    %1478 = vmatpush1.msra.mxu0 0.0
    %1479 = vmatprep.subr.mxu0 0.0
    %1480 = vmatpush1.msra.mxu0 0.0
    %1481 = vmatprep.subr.mxu0 0.0
    %1482 = vmatpush1.msra.mxu0 0.0
    %1483 = vmatprep.subr.mxu0 0.0
    %1484 = vmatpush1.msra.mxu0 0.0
    %1485 = vmatprep.subr.mxu0 0.0
    %1486 = vmatpush1.msra.mxu0 0.0
    %1487 = vmatprep.subr.mxu0 0.0
    %1488 = vmatpush1.msra.mxu0 0.0
    %1489 = vmatprep.subr.mxu0 0.0
    %1490 = vmatpush1.msra.mxu0 0.0
    %1491 = vmatprep.subr.mxu0 0.0
    %1492 = vmatpush1.msra.mxu0 0.0
    %1493 = vmatprep.subr.mxu0 0.0
    %1494 = vmatpush1.msra.mxu0 0.0
    %1495 = vmatprep.subr.mxu0 0.0
    %1496 = vmatpush1.msra.mxu0 0.0
    %1497 = vmatprep.subr.mxu0 0.0
    %1498 = vmatpush1.msra.mxu0 0.0
    %1499 = vmatprep.subr.mxu0 0.0
    %1500 = vmatpush1.msra.mxu0 0.0
    %1501 = vmatprep.subr.mxu0 0.0
    %1502 = vmatpush1.msra.mxu0 0.0
    %1503 = vmatprep.subr.mxu0 0.0
    %1504 = vmatpush1.msra.mxu0 0.0
    %1505 = vmatprep.subr.mxu0 0.0
    %1506 = vmatpush1.msra.mxu0 0.0
    %1507 = vmatprep.subr.mxu0 0.0
    %1508 = vmatpush1.msra.mxu0 0.0
    %1509 = vmatprep.subr.mxu0 0.0
    %1510 = vmatpush1.msra.mxu0 0.0
    %1511 = vmatprep.subr.mxu0 0.0
    %1512 = vmatpush1.msra.mxu0 0.0
    %1513 = vmatprep.subr.mxu0 0.0
    %1514 = vmatpush1.msra.mxu0 0.0
    %1515 = vmatprep.subr.mxu0 0.0
    %1516 = vmatpush1.msra.mxu0 0.0
    %1517 = vmatprep.subr.mxu0 0.0
    %1518 = vmatpush1.msra.mxu0 0.0
    %1519 = vmatprep.mubr.f32.mxu0 0.0
    %1520 = vmatmul.mubr.f32.gmra.mrb[0].mxu0 %v1453
    %v1521 = vpop.f32.mrb[0].mxu0
    %v1522 = vadd.f32 0.0, %v1521
    %v1523 = vpop.f32.mrb[0].mxu0
    %1524 = vdwg.mxu0
    %1527 = vrot.lane.b32.xlu0 %v786, 8
    %v1528 = vpop.permute.xlu0 %1527
    %1529 = vrot.lane.b32.xlu0 %v862, 8
    %v1530 = vpop.permute.xlu0 %1529
    %1535 = vrot.lane.b32.xlu0 %v1116, 16
    %v1536 = vpop.permute.xlu0 %1535
    %1537 = vrot.lane.b32.xlu0 %v1192, 16
    %v1538 = vpop.permute.xlu0 %1537
    %1543 = vrot.lane.b32.xlu0 %v1446, 24
    %v1544 = vpop.permute.xlu0 %1543
    %1545 = vrot.lane.b32.xlu0 %v1522, 24
    %v1546 = vpop.permute.xlu0 %1545
    %v1549 = vsel %vm205, %v455, %v1528
    %v1550 = vsel %vm205, %v532, %v1530
    %vm1551 = vcmask 130048
    %v1552 = vsel %vm1551, %v1549, %v1536
    %v1553 = vsel %vm1551, %v1550, %v1538
    %vm1554 = vcmask 195584
    %v1555 = vsel %vm1554, %v1552, %v1544
    %v1556 = vsel %vm1554, %v1553, %v1546
    %v1557 = vld [vmem:[#allocation7] sm:$0xff]
    %v1558 = vld [vmem:[#allocation7 + $0x8] sm:$0xff]
    %v1559 = vld [vmem:[#allocation7 + $0x10] sm:$0xff]
    %v1560 = vld [vmem:[#allocation7 + $0x18] sm:$0xff]
    %v1561 = vld [vmem:[%s4] sm:$0x1]
    %v1563 = vlaneseq
    %v1564 = vshrl.u32 %v1563, 7
    %v1565 = vsub.s32 0, %v1564
    %v1566 = vrot.slane %v1561, %v1565
    %v1569 = vsel %vm87, %v1555, 0
    %v1572 = vsel %vm87, %v1556, 0
    %1574 = vmatprep.subr.mxu0 0.0
    %1575 = vmatpush1.msra.mxu0 %v1557
    %1576 = vmatprep.subr.mxu0 0.0
    %1577 = vmatpush1.msra.mxu0 %v1558
    %1578 = vmatprep.subr.mxu0 0.0
    %1579 = vmatpush1.msra.mxu0 %v1559
    %1580 = vmatprep.subr.mxu0 0.0
    %1581 = vmatpush1.msra.mxu0 %v1560
    %1582 = vmatprep.subr.mxu0 0.0
    %1583 = vmatpush1.msra.mxu0 0.0
    %1584 = vmatprep.subr.mxu0 0.0
    %1585 = vmatpush1.msra.mxu0 0.0
    %1586 = vmatprep.subr.mxu0 0.0
    %1587 = vmatpush1.msra.mxu0 0.0
    %1588 = vmatprep.subr.mxu0 0.0
    %1589 = vmatpush1.msra.mxu0 0.0
    %1590 = vmatprep.subr.mxu0 0.0
    %1591 = vmatpush1.msra.mxu0 0.0
    %1592 = vmatprep.subr.mxu0 0.0
    %1593 = vmatpush1.msra.mxu0 0.0
    %1594 = vmatprep.subr.mxu0 0.0
    %1595 = vmatpush1.msra.mxu0 0.0
    %1596 = vmatprep.subr.mxu0 0.0
    %1597 = vmatpush1.msra.mxu0 0.0
    %1598 = vmatprep.subr.mxu0 0.0
    %1599 = vmatpush1.msra.mxu0 0.0
    %1600 = vmatprep.subr.mxu0 0.0
    %1601 = vmatpush1.msra.mxu0 0.0
    %1602 = vmatprep.subr.mxu0 0.0
    %1603 = vmatpush1.msra.mxu0 0.0
    %1604 = vmatprep.subr.mxu0 0.0
    %1605 = vmatpush1.msra.mxu0 0.0
    %1606 = vmatprep.subr.mxu0 0.0
    %1607 = vmatpush1.msra.mxu0 0.0
    %1608 = vmatprep.subr.mxu0 0.0
    %1609 = vmatpush1.msra.mxu0 0.0
    %1610 = vmatprep.subr.mxu0 0.0
    %1611 = vmatpush1.msra.mxu0 0.0
    %1612 = vmatprep.subr.mxu0 0.0
    %1613 = vmatpush1.msra.mxu0 0.0
    %1614 = vmatprep.subr.mxu0 0.0
    %1615 = vmatpush1.msra.mxu0 0.0
    %1616 = vmatprep.subr.mxu0 0.0
    %1617 = vmatpush1.msra.mxu0 0.0
    %1618 = vmatprep.subr.mxu0 0.0
    %1619 = vmatpush1.msra.mxu0 0.0
    %1620 = vmatprep.subr.mxu0 0.0
    %1621 = vmatpush1.msra.mxu0 0.0
    %1622 = vmatprep.subr.mxu0 0.0
    %1623 = vmatpush1.msra.mxu0 0.0
    %1624 = vmatprep.subr.mxu0 0.0
    %1625 = vmatpush1.msra.mxu0 0.0
    %1626 = vmatprep.subr.mxu0 0.0
    %1627 = vmatpush1.msra.mxu0 0.0
    %1628 = vmatprep.subr.mxu0 0.0
    %1629 = vmatpush1.msra.mxu0 0.0
    %1630 = vmatprep.subr.mxu0 0.0
    %1631 = vmatpush1.msra.mxu0 0.0
    %1632 = vmatprep.subr.mxu0 0.0
    %1633 = vmatpush1.msra.mxu0 0.0
    %1634 = vmatprep.subr.mxu0 0.0
    %1635 = vmatpush1.msra.mxu0 0.0
    %1636 = vmatprep.subr.mxu0 0.0
    %1637 = vmatpush1.msra.mxu0 0.0
    %1638 = vmatprep.mubr.f32.mxu0 0.0
    %1639 = vmatmul.mubr.f32.gmra.mrb[0].mxu0 %v1569
    %v1640 = vpop.f32.mrb[0].mxu0
    %v1641 = vadd.f32 %v1566, %v1640
    %v1642 = vpop.f32.mrb[0].mxu0
    %1643 = vmatprep.mubr.f32.mxu0 0.0
    %1644 = vmatmul.mubr.f32.gmra.mrb[0].mxu0 %v1572
    %v1645 = vpop.f32.mrb[0].mxu0
    %v1646 = vadd.f32 %v1566, %v1645
    %v1647 = vpop.f32.mrb[0].mxu0
    %1648 = vdwg.mxu0
    %1649 = vst.msk [vmem:[#allocation8] sm:$0xff] %vm87, %v1641
    %1650 = vst.msk [vmem:[#allocation8 + $0x8] sm:$0xff] %vm87, %v1646
    %1651 = vst.msk [vmem:[#allocation9] sm:$0xff] %vm205, %v379
    %1652 = vst.msk [vmem:[#allocation9 + $0x8] sm:$0xff] %vm205, %v711
    %1653 = vst.msk [vmem:[#allocation9 + $0x10] sm:$0xff] %vm205, %v1041
    %1654 = vst.msk [vmem:[#allocation9 + $0x18] sm:$0xff] %vm205, %v1371
    %1655 = vst.msk [vmem:[#allocation9 + $0x20] sm:$0xff] %vm205, %v380
    %1656 = vst.msk [vmem:[#allocation9 + $0x28] sm:$0xff] %vm205, %v712
    %1657 = vst.msk [vmem:[#allocation9 + $0x30] sm:$0xff] %vm205, %v1042
    %1658 = vst.msk [vmem:[#allocation9 + $0x38] sm:$0xff] %vm205, %v1372
    // Predicated region
    $region46: #{tpu_custom_call.1} parent=1 // pred_check
      _
    $region47: #{tpu_custom_call.1} parent=1 // pred_check_branch
      %1660 = sbr.rel (0) target = $region49
    $region48: #{tpu_custom_call.1} parent=1 // pred_region
      %s1662 = ssub.s32 256, 256
      %1663 = vsyncadd [#allocation4], %s1662
      %s1664 = sshll.u32 [#allocation8], 4
      %s1665 = int_to_ptr.vmem [resolvable:$true] %s1664
      %1670 = dma.vmem_to_hbm [thread:$0]  %s1665, 256, %s8, [#allocation4], 128, 128, 8
    $region49: #{tpu_custom_call.1} parent=1 // pred_fallthru
      _
    // Predicated region
    $region50: #{tpu_custom_call.1} parent=1 // pred_check
      _
    $region51: #{tpu_custom_call.1} parent=1 // pred_check_branch
      %1672 = sbr.rel (0) target = $region53
    $region52: #{tpu_custom_call.1} parent=1 // pred_region
      %s1674 = ssub.s32 1024, 1024
      %1675 = vsyncadd [#allocation10], %s1674
      %s1676 = sshll.u32 [#allocation9], 4
      %s1677 = int_to_ptr.vmem [resolvable:$true] %s1676
      %1682 = dma.vmem_to_hbm [thread:$0]  %s1677, 1024, %s9, [#allocation10], 128, 128, 8
    $region53: #{tpu_custom_call.1} parent=1 // pred_fallthru
      _
    // Predicated region
    $region54: #{tpu_custom_call.1} parent=1 // pred_check
      _
    $region55: #{tpu_custom_call.1} parent=1 // pred_check_branch
      %1684 = sbr.rel (0) target = $region57
    $region56: #{tpu_custom_call.1} parent=1 // pred_region
      %1685 = dma.done [#allocation4], 256
    $region57: #{tpu_custom_call.1} parent=1 // pred_fallthru
      _
    // Predicated region
    $region58: #{tpu_custom_call.1} parent=1 // pred_check
      _
    $region59: #{tpu_custom_call.1} parent=1 // pred_check_branch
      %1687 = sbr.rel (0) target = $region61
    $region60: #{tpu_custom_call.1} parent=1 // pred_region
      %1688 = dma.done [#allocation10], 1024
    $region61: #{tpu_custom_call.1} parent=1 // pred_fallthru
      _
    %1689 = vsyncpa [#allocation3], 1
    %1690 = vsyncpa [#allocation6], 1
    %1691 = vsyncpa [#allocation4], 1
    %1692 = vsyncpa [#allocation10], 1

</llo_original>
